<compile_context>
chip_gen: v7x
topology: tpu7x:2x2x1
jax: 0.10.0
libtpu: 0.0.40
codegen_flags: <defaults>
</compile_context>

<pallas_src>
import functools

import jax
import jax.numpy as jnp
from jax.experimental import pallas as pl
from jax.experimental.pallas import tpu as pltpu


def _round_up(x, m):
    return ((x + m - 1) // m) * m


def dcmlp_r2_kernel(
    x_ref,
    w12_ref, b12_ref,
    w2x_ref, b2x_ref,    # concat of fc2_3 | fc2_4 -> [h0, h1 + h2]
    w3x_ref, b3x_ref,    # concat of fc3_4 | fc3_5 -> [h1, h2 + h3]
    w45_ref, b45_ref,
    w56_ref, b56_ref,
    out_ref,
    *, split23, split34,
):
    f32 = jnp.float32

    def linear(h, w_ref, b_ref):
        w = w_ref[...]
        # bf16 (or f32) MXU matmul with f32 accumulation; bias add in f32.
        return jnp.dot(h.astype(w.dtype), w, preferred_element_type=f32) + b_ref[...]

    x = x_ref[...].astype(f32)

    # x = relu(fc1_2(x))
    h2 = jnp.maximum(linear(x, w12_ref, b12_ref), 0.0)

    # One 128-lane matmul for fc2_3 | fc2_4, then split.
    y2 = linear(h2, w2x_ref, b2x_ref)
    h3 = jnp.maximum(y2[:, :split23], 0.0)          # relu(fc2_3(h2))
    x2_4 = y2[:, split23:]                          # fc2_4(h2)

    # One 128-lane matmul for fc3_4 | fc3_5, then split.
    y3 = linear(h3, w3x_ref, b3x_ref)
    h4 = jnp.maximum(y3[:, :split34] + x2_4, 0.0)   # relu(fc3_4(h3) + x2_4)
    x3_5 = y3[:, split34:]                          # fc3_5(h3)

    # x = relu(fc4_5(h4) + x3_5)
    h5 = jnp.maximum(linear(h4, w45_ref, b45_ref) + x3_5, 0.0)

    # logits = fc5_6(h5)
    logits = linear(h5, w56_ref, b56_ref)

    # log_softmax over dim=1 (lane axis); f32 throughout.
    # TODO(synk): if profiling shows masked vst.msk stores binding, pad the
    # output to 128 lanes (mask padded logits to -inf) and slice in the wrapper.
    m = jnp.max(logits, axis=1, keepdims=True)
    shifted = logits - m
    lse = jnp.log(jnp.sum(jnp.exp(shifted), axis=1, keepdims=True))
    out_ref[...] = (shifted - lse).astype(out_ref.dtype)


def init_params(key, input_size, output_size, hidden_sizes,
                param_dtype=jnp.bfloat16):
    """PyTorch-style uniform(+/- 1/sqrt(fan_in)) init.

    Returns [(W [in,out], b [1,out]), ...] for
    [fc1_2, fc2_3, fc2_4, fc3_4, fc3_5, fc4_5, fc5_6].
    Weights are cast to `param_dtype` (bf16 by default for MXU throughput);
    biases stay f32 (they are added post-matmul in f32).
    """
    dims = [
        (input_size, hidden_sizes[0]),        # fc1_2
        (hidden_sizes[0], hidden_sizes[1]),   # fc2_3
        (hidden_sizes[0], hidden_sizes[2]),   # fc2_4
        (hidden_sizes[1], hidden_sizes[2]),   # fc3_4
        (hidden_sizes[1], hidden_sizes[3]),   # fc3_5
        (hidden_sizes[2], hidden_sizes[3]),   # fc4_5
        (hidden_sizes[3], output_size),       # fc5_6
    ]
    params = []
    keys = jax.random.split(key, 2 * len(dims))
    for i, (fan_in, fan_out) in enumerate(dims):
        bound = 1.0 / float(fan_in) ** 0.5
        w = jax.random.uniform(keys[2 * i], (fan_in, fan_out), jnp.float32,
                               -bound, bound).astype(param_dtype)
        b = jax.random.uniform(keys[2 * i + 1], (1, fan_out), jnp.float32,
                               -bound, bound)
        params.append((w, b))
    return params


def dcmlp_r2_forward(x, params, output_size, *, tile_b=None):
    (w12, b12), (w23, b23), (w24, b24), (w34, b34), (w35, b35), \
        (w45, b45), (w56, b56) = params

    # Concatenate weight pairs that share an input activation -> 128-lane N.
    w2x = jnp.concatenate([w23, w24], axis=1)
    b2x = jnp.concatenate([b23, b24], axis=1)
    w3x = jnp.concatenate([w34, w35], axis=1)
    b3x = jnp.concatenate([b34, b35], axis=1)

    batch, input_size = x.shape
    h0 = w12.shape[1]
    h1 = w23.shape[1]
    h2s = w24.shape[1]
    h3s = w35.shape[1]
    assert w56.shape[1] == output_size

    # Batch tile: biggest that comfortably fits scoped VMEM on every
    # generation (activations ~6*TILE_B*64 f32 + streamed x/out double-buffers
    # stay well under the 48 MiB limit requested below even at TILE_B=2048).
    if tile_b is None:
        tile_b = 2048
    tile_b = min(_round_up(tile_b, 8), _round_up(batch, 8))

    padded = _round_up(batch, tile_b)
    if padded != batch:
        x = jnp.pad(x, ((0, padded - batch), (0, 0)))
    grid = (pl.cdiv(padded, tile_b),)

    weights = [w12, b12, w2x, b2x, w3x, b3x, w45, b45, w56, b56]

    def resident(arr):
        # Full-array block, same block index every grid step -> DMA'd once,
        # stays VMEM-resident across the batch tiles.
        return pl.BlockSpec(arr.shape, lambda i: (0, 0))

    in_specs = [pl.BlockSpec((tile_b, input_size), lambda i: (i, 0))]
    in_specs += [resident(a) for a in weights]
    out_spec = pl.BlockSpec((tile_b, output_size), lambda i: (i, 0))

    flops = 2 * padded * (
        input_size * h0 + h0 * (h1 + h2s) + h1 * (h2s + h3s)
        + h2s * h3s + h3s * output_size
    )
    bytes_accessed = (
        x.size * x.dtype.itemsize
        + sum(a.size * a.dtype.itemsize for a in weights)
        + padded * output_size * 4
    )
    transcendentals = padded * (output_size + 1)   # exp per logit + log per row

    kernel = functools.partial(dcmlp_r2_kernel, split23=h1, split34=h2s)

    return pl.pallas_call(
        kernel,
        out_shape=jax.ShapeDtypeStruct((padded, output_size), jnp.float32),
        grid=grid,
        in_specs=in_specs,
        out_specs=out_spec,
        compiler_params=pltpu.CompilerParams(
            dimension_semantics=("parallel",),        # v7x: shard tiles on 2 TCs
            vmem_limit_bytes=48 * 1024 * 1024,        # above 16/32 MiB defaults
        ),
        cost_estimate=pl.CostEstimate(
            flops=flops,
            transcendentals=transcendentals,
            bytes_accessed=bytes_accessed,
        ),
    )(x, *weights)[:batch]


def dcmlp_r2_reference(x, params):
    """Pure-JAX f32 reference using the same (possibly bf16-stored) weights."""
    def lin(h, wb):
        w, b = wb
        return h @ w.astype(jnp.float32) + b.astype(jnp.float32)

    h2 = jax.nn.relu(lin(x, params[0]))
    x2_4 = lin(h2, params[2])
    h3 = jax.nn.relu(lin(h2, params[1]))
    x3_5 = lin(h3, params[4])
    h4 = jax.nn.relu(lin(h3, params[3]) + x2_4)
    h5 = jax.nn.relu(lin(h4, params[5]) + x3_5)
    logits = lin(h5, params[6])
    return jax.nn.log_softmax(logits, axis=1)


if __name__ == "__main__":
    # Small shapes consistent with the module's 2-D [batch, features] forward.
    batch = 256
    input_size = 64
    hidden_sizes = (64, 64, 64, 64)
    output_size = 32
    tile_b = 128          # grid of 2 -> exercises pipelining / both v7x TCs

    key = jax.random.PRNGKey(0)
    k_x, k_p = jax.random.split(key)
    x = jax.random.normal(k_x, (batch, input_size), jnp.float32)
    params = init_params(k_p, input_size, output_size, hidden_sizes,
                         param_dtype=jnp.bfloat16)

    out = dcmlp_r2_forward(x, params, output_size, tile_b=tile_b)
    out = jax.block_until_ready(out)

    ref = dcmlp_r2_reference(x, params)
    assert out.shape == (batch, output_size)
    # bf16 matmul inputs (f32 accumulation) vs pure-f32 reference -> loose tol.
    assert jnp.allclose(out, ref, atol=5e-2, rtol=5e-2), (
        float(jnp.max(jnp.abs(out - ref))))
    # log_softmax sanity: rows sum to 1 in probability space.
    assert jnp.allclose(jnp.sum(jnp.exp(out), axis=1), 1.0, atol=1e-3)

    print("KERNEL_OK")
</pallas_src>

<mosaic_0001>
module attributes {stable_mosaic.version = 11 : i64} {
  func.func @dcmlp_r2_kernel(%arg0: i32, %arg1: memref<128x64xf32, #tpu.memory_space<vmem>>, %arg2: memref<64x64xbf16, #tpu.memory_space<vmem>>, %arg3: memref<1x64xf32, #tpu.memory_space<vmem>>, %arg4: memref<64x128xbf16, #tpu.memory_space<vmem>>, %arg5: memref<1x128xf32, #tpu.memory_space<vmem>>, %arg6: memref<64x128xbf16, #tpu.memory_space<vmem>>, %arg7: memref<1x128xf32, #tpu.memory_space<vmem>>, %arg8: memref<64x64xbf16, #tpu.memory_space<vmem>>, %arg9: memref<1x64xf32, #tpu.memory_space<vmem>>, %arg10: memref<64x32xbf16, #tpu.memory_space<vmem>>, %arg11: memref<1x32xf32, #tpu.memory_space<vmem>>, %arg12: memref<128x32xf32, #tpu.memory_space<vmem>>) attributes {dimension_semantics = [#tpu.dimension_semantics<parallel>], iteration_bounds = array<i64: 2>, scalar_prefetch = 0 : i64, scratch_operands = 0 : i64, tpu.core_type = #tpu.core_type<tc>, window_params = [{transform_indices = @transform_0, window_bounds = array<i64: 128, 64>}, {pipeline_mode = #tpu.pipeline_mode<synchronous>, transform_indices = @transform_1, window_bounds = array<i64: 64, 64>}, {pipeline_mode = #tpu.pipeline_mode<synchronous>, transform_indices = @transform_2, window_bounds = array<i64: 1, 64>}, {pipeline_mode = #tpu.pipeline_mode<synchronous>, transform_indices = @transform_3, window_bounds = array<i64: 64, 128>}, {pipeline_mode = #tpu.pipeline_mode<synchronous>, transform_indices = @transform_4, window_bounds = array<i64: 1, 128>}, {pipeline_mode = #tpu.pipeline_mode<synchronous>, transform_indices = @transform_5, window_bounds = array<i64: 64, 128>}, {pipeline_mode = #tpu.pipeline_mode<synchronous>, transform_indices = @transform_6, window_bounds = array<i64: 1, 128>}, {pipeline_mode = #tpu.pipeline_mode<synchronous>, transform_indices = @transform_7, window_bounds = array<i64: 64, 64>}, {pipeline_mode = #tpu.pipeline_mode<synchronous>, transform_indices = @transform_8, window_bounds = array<i64: 1, 64>}, {pipeline_mode = #tpu.pipeline_mode<synchronous>, transform_indices = @transform_9, window_bounds = array<i64: 64, 32>}, {pipeline_mode = #tpu.pipeline_mode<synchronous>, transform_indices = @transform_10, window_bounds = array<i64: 1, 32>}, {transform_indices = @transform_11, window_bounds = array<i64: 128, 32>}]} {
    %c0 = arith.constant 0 : index
    %c0_0 = arith.constant 0 : index
    %0 = vector.load %arg1[%c0, %c0_0] : memref<128x64xf32, #tpu.memory_space<vmem>>, vector<128x64xf32>
    %c0_1 = arith.constant 0 : index
    %c0_2 = arith.constant 0 : index
    %1 = vector.load %arg2[%c0_1, %c0_2] : memref<64x64xbf16, #tpu.memory_space<vmem>>, vector<64x64xbf16>
    %2 = arith.truncf %0 : vector<128x64xf32> to vector<128x64xbf16>
    %cst = arith.constant dense<0.000000e+00> : vector<128x64xf32>
    %3 = tpu.matmul %2, %1, %cst {dimension_numbers = #tpu.dot_dimension_numbers<[1], [0], [0], [1], [0, 0, 1, 1], [], []>} : vector<128x64xbf16>, vector<64x64xbf16>, vector<128x64xf32> -> vector<128x64xf32>
    %c0_3 = arith.constant 0 : index
    %c0_4 = arith.constant 0 : index
    %4 = vector.load %arg3[%c0_3, %c0_4] : memref<1x64xf32, #tpu.memory_space<vmem>>, vector<1x64xf32>
    %5 = vector.broadcast %4 : vector<1x64xf32> to vector<128x64xf32>
    %6 = arith.addf %3, %5 : vector<128x64xf32>
    %cst_5 = arith.constant 0.000000e+00 : f32
    %7 = vector.broadcast %cst_5 : f32 to vector<128x64xf32>
    %8 = arith.maximumf %6, %7 : vector<128x64xf32>
    %c0_6 = arith.constant 0 : index
    %c0_7 = arith.constant 0 : index
    %9 = vector.load %arg4[%c0_6, %c0_7] : memref<64x128xbf16, #tpu.memory_space<vmem>>, vector<64x128xbf16>
    %10 = arith.truncf %8 : vector<128x64xf32> to vector<128x64xbf16>
    %cst_8 = arith.constant dense<0.000000e+00> : vector<128x128xf32>
    %11 = tpu.matmul %10, %9, %cst_8 {dimension_numbers = #tpu.dot_dimension_numbers<[1], [0], [0], [1], [0, 0, 1, 1], [], []>} : vector<128x64xbf16>, vector<64x128xbf16>, vector<128x128xf32> -> vector<128x128xf32>
    %c0_9 = arith.constant 0 : index
    %c0_10 = arith.constant 0 : index
    %12 = vector.load %arg5[%c0_9, %c0_10] : memref<1x128xf32, #tpu.memory_space<vmem>>, vector<1x128xf32>
    %13 = vector.broadcast %12 : vector<1x128xf32> to vector<128x128xf32>
    %14 = arith.addf %11, %13 : vector<128x128xf32>
    %15 = vector.extract_strided_slice %14 {offsets = [0, 0], sizes = [128, 64], strides = [1, 1]} : vector<128x128xf32> to vector<128x64xf32>
    %cst_11 = arith.constant 0.000000e+00 : f32
    %16 = vector.broadcast %cst_11 : f32 to vector<128x64xf32>
    %17 = arith.maximumf %15, %16 : vector<128x64xf32>
    %18 = vector.extract_strided_slice %14 {offsets = [0, 64], sizes = [128, 64], strides = [1, 1]} : vector<128x128xf32> to vector<128x64xf32>
    %c0_12 = arith.constant 0 : index
    %c0_13 = arith.constant 0 : index
    %19 = vector.load %arg6[%c0_12, %c0_13] : memref<64x128xbf16, #tpu.memory_space<vmem>>, vector<64x128xbf16>
    %20 = arith.truncf %17 : vector<128x64xf32> to vector<128x64xbf16>
    %cst_14 = arith.constant dense<0.000000e+00> : vector<128x128xf32>
    %21 = tpu.matmul %20, %19, %cst_14 {dimension_numbers = #tpu.dot_dimension_numbers<[1], [0], [0], [1], [0, 0, 1, 1], [], []>} : vector<128x64xbf16>, vector<64x128xbf16>, vector<128x128xf32> -> vector<128x128xf32>
    %c0_15 = arith.constant 0 : index
    %c0_16 = arith.constant 0 : index
    %22 = vector.load %arg7[%c0_15, %c0_16] : memref<1x128xf32, #tpu.memory_space<vmem>>, vector<1x128xf32>
    %23 = vector.broadcast %22 : vector<1x128xf32> to vector<128x128xf32>
    %24 = arith.addf %21, %23 : vector<128x128xf32>
    %25 = vector.extract_strided_slice %24 {offsets = [0, 0], sizes = [128, 64], strides = [1, 1]} : vector<128x128xf32> to vector<128x64xf32>
    %26 = arith.addf %25, %18 : vector<128x64xf32>
    %cst_17 = arith.constant 0.000000e+00 : f32
    %27 = vector.broadcast %cst_17 : f32 to vector<128x64xf32>
    %28 = arith.maximumf %26, %27 : vector<128x64xf32>
    %29 = vector.extract_strided_slice %24 {offsets = [0, 64], sizes = [128, 64], strides = [1, 1]} : vector<128x128xf32> to vector<128x64xf32>
    %c0_18 = arith.constant 0 : index
    %c0_19 = arith.constant 0 : index
    %30 = vector.load %arg8[%c0_18, %c0_19] : memref<64x64xbf16, #tpu.memory_space<vmem>>, vector<64x64xbf16>
    %31 = arith.truncf %28 : vector<128x64xf32> to vector<128x64xbf16>
    %cst_20 = arith.constant dense<0.000000e+00> : vector<128x64xf32>
    %32 = tpu.matmul %31, %30, %cst_20 {dimension_numbers = #tpu.dot_dimension_numbers<[1], [0], [0], [1], [0, 0, 1, 1], [], []>} : vector<128x64xbf16>, vector<64x64xbf16>, vector<128x64xf32> -> vector<128x64xf32>
    %c0_21 = arith.constant 0 : index
    %c0_22 = arith.constant 0 : index
    %33 = vector.load %arg9[%c0_21, %c0_22] : memref<1x64xf32, #tpu.memory_space<vmem>>, vector<1x64xf32>
    %34 = vector.broadcast %33 : vector<1x64xf32> to vector<128x64xf32>
    %35 = arith.addf %32, %34 : vector<128x64xf32>
    %36 = arith.addf %35, %29 : vector<128x64xf32>
    %cst_23 = arith.constant 0.000000e+00 : f32
    %37 = vector.broadcast %cst_23 : f32 to vector<128x64xf32>
    %38 = arith.maximumf %36, %37 : vector<128x64xf32>
    %c0_24 = arith.constant 0 : index
    %c0_25 = arith.constant 0 : index
    %39 = vector.load %arg10[%c0_24, %c0_25] : memref<64x32xbf16, #tpu.memory_space<vmem>>, vector<64x32xbf16>
    %40 = arith.truncf %38 : vector<128x64xf32> to vector<128x64xbf16>
    %cst_26 = arith.constant dense<0.000000e+00> : vector<128x32xf32>
    %41 = tpu.matmul %40, %39, %cst_26 {dimension_numbers = #tpu.dot_dimension_numbers<[1], [0], [0], [1], [0, 0, 1, 1], [], []>} : vector<128x64xbf16>, vector<64x32xbf16>, vector<128x32xf32> -> vector<128x32xf32>
    %c0_27 = arith.constant 0 : index
    %c0_28 = arith.constant 0 : index
    %42 = vector.load %arg11[%c0_27, %c0_28] : memref<1x32xf32, #tpu.memory_space<vmem>>, vector<1x32xf32>
    %43 = vector.broadcast %42 : vector<1x32xf32> to vector<128x32xf32>
    %44 = arith.addf %41, %43 : vector<128x32xf32>
    %cst_29 = arith.constant dense<0xFF800000> : vector<128xf32>
    %45 = vector.multi_reduction <maximumf>, %44, %cst_29 [1] : vector<128x32xf32> to vector<128xf32>
    %46 = vector.shape_cast %45 : vector<128xf32> to vector<128x1xf32>
    %47 = vector.broadcast %46 : vector<128x1xf32> to vector<128x32xf32>
    %48 = arith.subf %44, %47 : vector<128x32xf32>
    %49 = math.exp %48 : vector<128x32xf32>
    %cst_30 = arith.constant dense<0.000000e+00> : vector<128xf32>
    %50 = vector.multi_reduction <add>, %49, %cst_30 [1] : vector<128x32xf32> to vector<128xf32>
    %51 = vector.shape_cast %50 : vector<128xf32> to vector<128x1xf32>
    %52 = math.log %51 : vector<128x1xf32>
    %53 = vector.broadcast %52 : vector<128x1xf32> to vector<128x32xf32>
    %54 = arith.subf %48, %53 : vector<128x32xf32>
    %c0_31 = arith.constant 0 : index
    %c0_32 = arith.constant 0 : index
    %55 = vector.load %arg12[%c0_31, %c0_32] : memref<128x32xf32, #tpu.memory_space<vmem>>, vector<128x32xf32>
    tpu.vector_store %arg12[%c0_31, %c0_32], %54 {strides = array<i32>} : memref<128x32xf32, #tpu.memory_space<vmem>>, vector<128x32xf32>,
    return
  }
  func.func @transform_0(%arg0: i32) -> (i32, i32) {
    %c0_i32 = arith.constant 0 : i32
    %c0_i32_0 = arith.constant 0 : i32
    return %arg0, %c0_i32 : i32, i32
  }
  func.func @transform_1(%arg0: i32) -> (i32, i32) {
    %c0_i32 = arith.constant 0 : i32
    %c0_i32_0 = arith.constant 0 : i32
    %c0_i32_1 = arith.constant 0 : i32
    return %c0_i32, %c0_i32_0 : i32, i32
  }
  func.func @transform_2(%arg0: i32) -> (i32, i32) {
    %c0_i32 = arith.constant 0 : i32
    %c0_i32_0 = arith.constant 0 : i32
    %c0_i32_1 = arith.constant 0 : i32
    return %c0_i32, %c0_i32_0 : i32, i32
  }
  func.func @transform_3(%arg0: i32) -> (i32, i32) {
    %c0_i32 = arith.constant 0 : i32
    %c0_i32_0 = arith.constant 0 : i32
    %c0_i32_1 = arith.constant 0 : i32
    return %c0_i32, %c0_i32_0 : i32, i32
  }
  func.func @transform_4(%arg0: i32) -> (i32, i32) {
    %c0_i32 = arith.constant 0 : i32
    %c0_i32_0 = arith.constant 0 : i32
    %c0_i32_1 = arith.constant 0 : i32
    return %c0_i32, %c0_i32_0 : i32, i32
  }
  func.func @transform_5(%arg0: i32) -> (i32, i32) {
    %c0_i32 = arith.constant 0 : i32
    %c0_i32_0 = arith.constant 0 : i32
    %c0_i32_1 = arith.constant 0 : i32
    return %c0_i32, %c0_i32_0 : i32, i32
  }
  func.func @transform_6(%arg0: i32) -> (i32, i32) {
    %c0_i32 = arith.constant 0 : i32
    %c0_i32_0 = arith.constant 0 : i32
    %c0_i32_1 = arith.constant 0 : i32
    return %c0_i32, %c0_i32_0 : i32, i32
  }
  func.func @transform_7(%arg0: i32) -> (i32, i32) {
    %c0_i32 = arith.constant 0 : i32
    %c0_i32_0 = arith.constant 0 : i32
    %c0_i32_1 = arith.constant 0 : i32
    return %c0_i32, %c0_i32_0 : i32, i32
  }
  func.func @transform_8(%arg0: i32) -> (i32, i32) {
    %c0_i32 = arith.constant 0 : i32
    %c0_i32_0 = arith.constant 0 : i32
    %c0_i32_1 = arith.constant 0 : i32
    return %c0_i32, %c0_i32_0 : i32, i32
  }
  func.func @transform_9(%arg0: i32) -> (i32, i32) {
    %c0_i32 = arith.constant 0 : i32
    %c0_i32_0 = arith.constant 0 : i32
    %c0_i32_1 = arith.constant 0 : i32
    return %c0_i32, %c0_i32_0 : i32, i32
  }
  func.func @transform_10(%arg0: i32) -> (i32, i32) {
    %c0_i32 = arith.constant 0 : i32
    %c0_i32_0 = arith.constant 0 : i32
    %c0_i32_1 = arith.constant 0 : i32
    return %c0_i32, %c0_i32_0 : i32, i32
  }
  func.func @transform_11(%arg0: i32) -> (i32, i32) {
    %c0_i32 = arith.constant 0 : i32
    %c0_i32_0 = arith.constant 0 : i32
    return %arg0, %c0_i32 : i32, i32
  }
}

</mosaic_0001>

<llo_original>
// kernel: tpu_custom_call.1
$region0: #{tpu_custom_call.1}
  #allocation0 [shape = 'u32[]', space=smem, size = 0x4, offset = 0x4, fixed_abs, tag = 'smem constant byte address 0x4 - core index']
  #allocation1 [shape = 'u32[144,128]{1,0:T(1,128)}', space=vmem, size = 0x12000, scoped, tag = 'internal scratch']
  %s0 = inlined_call_operand.vmem [shape: f32[256,64], index: 0, kind: input, shape index: {}]
  %s1 = inlined_call_operand.vmem [shape: bf16[64,64], index: 1, kind: input, shape index: {}]
  %s2 = inlined_call_operand.vmem [shape: f32[1,64], index: 2, kind: input, shape index: {}]
  %s3 = inlined_call_operand.vmem [shape: bf16[64,128], index: 3, kind: input, shape index: {}]
  %s4 = inlined_call_operand.vmem [shape: f32[1,128], index: 4, kind: input, shape index: {}]
  %s5 = inlined_call_operand.vmem [shape: bf16[64,128], index: 5, kind: input, shape index: {}]
  %s6 = inlined_call_operand.vmem [shape: f32[1,128], index: 6, kind: input, shape index: {}]
  %s7 = inlined_call_operand.vmem [shape: bf16[64,64], index: 7, kind: input, shape index: {}]
  %s8 = inlined_call_operand.vmem [shape: f32[1,64], index: 8, kind: input, shape index: {}]
  %s9 = inlined_call_operand.vmem [shape: bf16[64,32], index: 9, kind: input, shape index: {}]
  %s10 = inlined_call_operand.vmem [shape: f32[1,32], index: 10, kind: input, shape index: {}]
  %s11 = inlined_call_operand.vmem [shape: f32[256,32], index: 11, kind: output, shape index: {}]
  %s12 = sld [smem:[#allocation0]]
  $region77: #{tpu_custom_call.1} parent=0
    _
  %s14 = ssub.s32 1, %s12
  %s15 = scalar_select 0, %s14, %s12
  loop: start=0, step=1, limit=4
  $region2: #{tpu_custom_call.1} parent=0 // loop_pre_header
    _
  $region3: #{tpu_custom_call.1} parent=0 // loop_header
    %s17 = sphi 0, %s21
    %p18 = scmp.ge.s32.totalorder %s17, 4
    %s27 = sphi 0, %s29
    %s30 = sphi 0, %s27
    %s31 = sphi 0, %s30
    %s47 = sphi 0, %s31
    %s51 = sphi 0, %s51
    %s53 = sphi 0, %s51
    %s54 = sphi 0, %s53
    %s68 = sphi 0, %s54
    %s72 = sphi 0, %s72
    %s74 = sphi 0, %s72
    %s75 = sphi 0, %s74
    %s89 = sphi 0, %s75
    %s93 = sphi 0, %s93
    %s95 = sphi 0, %s93
    %s96 = sphi 0, %s95
    %s110 = sphi 0, %s96
    %s114 = sphi 0, %s114
    %s116 = sphi 0, %s114
    %s117 = sphi 0, %s116
    %s131 = sphi 0, %s117
    %s135 = sphi 0, %s135
    %s137 = sphi 0, %s135
    %s138 = sphi 0, %s137
    %s152 = sphi 0, %s138
    %s156 = sphi 0, %s156
    %s158 = sphi 0, %s156
    %s159 = sphi 0, %s158
    %s173 = sphi 0, %s159
    %s177 = sphi 0, %s177
    %s179 = sphi 0, %s177
    %s180 = sphi 0, %s179
    %s194 = sphi 0, %s180
    %s198 = sphi 0, %s198
    %s200 = sphi 0, %s198
    %s201 = sphi 0, %s200
    %s215 = sphi 0, %s201
    %s219 = sphi 0, %s219
    %s221 = sphi 0, %s219
    %s222 = sphi 0, %s221
    %s236 = sphi 0, %s222
    %s240 = sphi 0, %s240
    %s242 = sphi 0, %s240
    %s243 = sphi 0, %s242
    %s257 = sphi 0, %s243
    %s263 = sphi 0, %s265
    %s266 = sphi 0, %s263
    %s267 = sphi 0, %s266
    %s283 = sphi 0, %s267
  $region4: #{tpu_custom_call.1} parent=0 // loop_header_branch
    %20 = sbr.rel (%p18) target = $region8
  $region5: #{tpu_custom_call.1} parent=0 // loop_body
    %s22 = ssub.s32 %s17, 1
    %s23 = ssub.s32 %s17, 2
    %s24 = sadd.s32 %s17, 1
    %s25 = ssub.s32 %s17, %s24
    %p26 = scmp.eq.s32.totalorder %s25, 0
    %s28 = sadd.s32 %s27, 1
    %s29 = scalar_select %p26, %s27, %s28
    %p32 = pneg %p26
    %p33 = scmp.eq.s32.totalorder %s17, 1
    %p34 = por %p32, %p33
    %p35 = scmp.ne.s32.totalorder %s27, %s30
    %p36 = scmp.eq.s32.totalorder %s17, 0
    %p37 = por %p35, %p36
    %p38 = scmp.ne.s32.totalorder %s27, %s30
    %p39 = scmp.eq.s32.totalorder %s22, 1
    %p40 = por %p38, %p39
    %p41 = scmp.ne.s32.totalorder %s30, %s31
    %p42 = scmp.eq.s32.totalorder %s22, 0
    %p43 = por %p41, %p42
    %p44 = scmp.ne.s32.totalorder %s30, %s31
    %p45 = scmp.eq.s32.totalorder %s23, 1
    %p46 = por %p44, %p45
    %p48 = scmp.ne.s32.totalorder %s31, %s47
    %p49 = scmp.eq.s32.totalorder %s23, 0
    %p50 = por %p48, %p49
    %s52 = sadd.s32 %s51, 1
    %p55 = scmp.eq.s32.totalorder %s17, 1
    %p56 = scmp.ne.s32.totalorder %s51, %s53
    %p57 = scmp.eq.s32.totalorder %s17, 0
    %p58 = por %p56, %p57
    %p59 = scmp.ne.s32.totalorder %s51, %s53
    %p60 = scmp.eq.s32.totalorder %s22, 1
    %p61 = por %p59, %p60
    %p62 = scmp.ne.s32.totalorder %s53, %s54
    %p63 = scmp.eq.s32.totalorder %s22, 0
    %p64 = por %p62, %p63
    %p65 = scmp.ne.s32.totalorder %s53, %s54
    %p66 = scmp.eq.s32.totalorder %s23, 1
    %p67 = por %p65, %p66
    %p69 = scmp.ne.s32.totalorder %s54, %s68
    %p70 = scmp.eq.s32.totalorder %s23, 0
    %p71 = por %p69, %p70
    %s73 = sadd.s32 %s72, 1
    %p76 = scmp.eq.s32.totalorder %s17, 1
    %p77 = scmp.ne.s32.totalorder %s72, %s74
    %p78 = scmp.eq.s32.totalorder %s17, 0
    %p79 = por %p77, %p78
    %p80 = scmp.ne.s32.totalorder %s72, %s74
    %p81 = scmp.eq.s32.totalorder %s22, 1
    %p82 = por %p80, %p81
    %p83 = scmp.ne.s32.totalorder %s74, %s75
    %p84 = scmp.eq.s32.totalorder %s22, 0
    %p85 = por %p83, %p84
    %p86 = scmp.ne.s32.totalorder %s74, %s75
    %p87 = scmp.eq.s32.totalorder %s23, 1
    %p88 = por %p86, %p87
    %p90 = scmp.ne.s32.totalorder %s75, %s89
    %p91 = scmp.eq.s32.totalorder %s23, 0
    %p92 = por %p90, %p91
    %s94 = sadd.s32 %s93, 1
    %p97 = scmp.eq.s32.totalorder %s17, 1
    %p98 = scmp.ne.s32.totalorder %s93, %s95
    %p99 = scmp.eq.s32.totalorder %s17, 0
    %p100 = por %p98, %p99
    %p101 = scmp.ne.s32.totalorder %s93, %s95
    %p102 = scmp.eq.s32.totalorder %s22, 1
    %p103 = por %p101, %p102
    %p104 = scmp.ne.s32.totalorder %s95, %s96
    %p105 = scmp.eq.s32.totalorder %s22, 0
    %p106 = por %p104, %p105
    %p107 = scmp.ne.s32.totalorder %s95, %s96
    %p108 = scmp.eq.s32.totalorder %s23, 1
    %p109 = por %p107, %p108
    %p111 = scmp.ne.s32.totalorder %s96, %s110
    %p112 = scmp.eq.s32.totalorder %s23, 0
    %p113 = por %p111, %p112
    %s115 = sadd.s32 %s114, 1
    %p118 = scmp.eq.s32.totalorder %s17, 1
    %p119 = scmp.ne.s32.totalorder %s114, %s116
    %p120 = scmp.eq.s32.totalorder %s17, 0
    %p121 = por %p119, %p120
    %p122 = scmp.ne.s32.totalorder %s114, %s116
    %p123 = scmp.eq.s32.totalorder %s22, 1
    %p124 = por %p122, %p123
    %p125 = scmp.ne.s32.totalorder %s116, %s117
    %p126 = scmp.eq.s32.totalorder %s22, 0
    %p127 = por %p125, %p126
    %p128 = scmp.ne.s32.totalorder %s116, %s117
    %p129 = scmp.eq.s32.totalorder %s23, 1
    %p130 = por %p128, %p129
    %p132 = scmp.ne.s32.totalorder %s117, %s131
    %p133 = scmp.eq.s32.totalorder %s23, 0
    %p134 = por %p132, %p133
    %s136 = sadd.s32 %s135, 1
    %p139 = scmp.eq.s32.totalorder %s17, 1
    %p140 = scmp.ne.s32.totalorder %s135, %s137
    %p141 = scmp.eq.s32.totalorder %s17, 0
    %p142 = por %p140, %p141
    %p143 = scmp.ne.s32.totalorder %s135, %s137
    %p144 = scmp.eq.s32.totalorder %s22, 1
    %p145 = por %p143, %p144
    %p146 = scmp.ne.s32.totalorder %s137, %s138
    %p147 = scmp.eq.s32.totalorder %s22, 0
    %p148 = por %p146, %p147
    %p149 = scmp.ne.s32.totalorder %s137, %s138
    %p150 = scmp.eq.s32.totalorder %s23, 1
    %p151 = por %p149, %p150
    %p153 = scmp.ne.s32.totalorder %s138, %s152
    %p154 = scmp.eq.s32.totalorder %s23, 0
    %p155 = por %p153, %p154
    %s157 = sadd.s32 %s156, 1
    %p160 = scmp.eq.s32.totalorder %s17, 1
    %p161 = scmp.ne.s32.totalorder %s156, %s158
    %p162 = scmp.eq.s32.totalorder %s17, 0
    %p163 = por %p161, %p162
    %p164 = scmp.ne.s32.totalorder %s156, %s158
    %p165 = scmp.eq.s32.totalorder %s22, 1
    %p166 = por %p164, %p165
    %p167 = scmp.ne.s32.totalorder %s158, %s159
    %p168 = scmp.eq.s32.totalorder %s22, 0
    %p169 = por %p167, %p168
    %p170 = scmp.ne.s32.totalorder %s158, %s159
    %p171 = scmp.eq.s32.totalorder %s23, 1
    %p172 = por %p170, %p171
    %p174 = scmp.ne.s32.totalorder %s159, %s173
    %p175 = scmp.eq.s32.totalorder %s23, 0
    %p176 = por %p174, %p175
    %s178 = sadd.s32 %s177, 1
    %p181 = scmp.eq.s32.totalorder %s17, 1
    %p182 = scmp.ne.s32.totalorder %s177, %s179
    %p183 = scmp.eq.s32.totalorder %s17, 0
    %p184 = por %p182, %p183
    %p185 = scmp.ne.s32.totalorder %s177, %s179
    %p186 = scmp.eq.s32.totalorder %s22, 1
    %p187 = por %p185, %p186
    %p188 = scmp.ne.s32.totalorder %s179, %s180
    %p189 = scmp.eq.s32.totalorder %s22, 0
    %p190 = por %p188, %p189
    %p191 = scmp.ne.s32.totalorder %s179, %s180
    %p192 = scmp.eq.s32.totalorder %s23, 1
    %p193 = por %p191, %p192
    %p195 = scmp.ne.s32.totalorder %s180, %s194
    %p196 = scmp.eq.s32.totalorder %s23, 0
    %p197 = por %p195, %p196
    %s199 = sadd.s32 %s198, 1
    %p202 = scmp.eq.s32.totalorder %s17, 1
    %p203 = scmp.ne.s32.totalorder %s198, %s200
    %p204 = scmp.eq.s32.totalorder %s17, 0
    %p205 = por %p203, %p204
    %p206 = scmp.ne.s32.totalorder %s198, %s200
    %p207 = scmp.eq.s32.totalorder %s22, 1
    %p208 = por %p206, %p207
    %p209 = scmp.ne.s32.totalorder %s200, %s201
    %p210 = scmp.eq.s32.totalorder %s22, 0
    %p211 = por %p209, %p210
    %p212 = scmp.ne.s32.totalorder %s200, %s201
    %p213 = scmp.eq.s32.totalorder %s23, 1
    %p214 = por %p212, %p213
    %p216 = scmp.ne.s32.totalorder %s201, %s215
    %p217 = scmp.eq.s32.totalorder %s23, 0
    %p218 = por %p216, %p217
    %s220 = sadd.s32 %s219, 1
    %p223 = scmp.eq.s32.totalorder %s17, 1
    %p224 = scmp.ne.s32.totalorder %s219, %s221
    %p225 = scmp.eq.s32.totalorder %s17, 0
    %p226 = por %p224, %p225
    %p227 = scmp.ne.s32.totalorder %s219, %s221
    %p228 = scmp.eq.s32.totalorder %s22, 1
    %p229 = por %p227, %p228
    %p230 = scmp.ne.s32.totalorder %s221, %s222
    %p231 = scmp.eq.s32.totalorder %s22, 0
    %p232 = por %p230, %p231
    %p233 = scmp.ne.s32.totalorder %s221, %s222
    %p234 = scmp.eq.s32.totalorder %s23, 1
    %p235 = por %p233, %p234
    %p237 = scmp.ne.s32.totalorder %s222, %s236
    %p238 = scmp.eq.s32.totalorder %s23, 0
    %p239 = por %p237, %p238
    %s241 = sadd.s32 %s240, 1
    %p244 = scmp.eq.s32.totalorder %s17, 1
    %p245 = scmp.ne.s32.totalorder %s240, %s242
    %p246 = scmp.eq.s32.totalorder %s17, 0
    %p247 = por %p245, %p246
    %p248 = scmp.ne.s32.totalorder %s240, %s242
    %p249 = scmp.eq.s32.totalorder %s22, 1
    %p250 = por %p248, %p249
    %p251 = scmp.ne.s32.totalorder %s242, %s243
    %p252 = scmp.eq.s32.totalorder %s22, 0
    %p253 = por %p251, %p252
    %p254 = scmp.ne.s32.totalorder %s242, %s243
    %p255 = scmp.eq.s32.totalorder %s23, 1
    %p256 = por %p254, %p255
    %p258 = scmp.ne.s32.totalorder %s243, %s257
    %p259 = scmp.eq.s32.totalorder %s23, 0
    %p260 = por %p258, %p259
    %s261 = ssub.s32 %s17, %s24
    %p262 = scmp.eq.s32.totalorder %s261, 0
    %s264 = sadd.s32 %s263, 1
    %s265 = scalar_select %p262, %s263, %s264
    %p268 = pneg %p262
    %p269 = scmp.eq.s32.totalorder %s17, 1
    %p270 = por %p268, %p269
    %p271 = scmp.ne.s32.totalorder %s263, %s266
    %p272 = scmp.eq.s32.totalorder %s17, 0
    %p273 = por %p271, %p272
    %p274 = scmp.ne.s32.totalorder %s263, %s266
    %p275 = scmp.eq.s32.totalorder %s22, 1
    %p276 = por %p274, %p275
    %p277 = scmp.ne.s32.totalorder %s266, %s267
    %p278 = scmp.eq.s32.totalorder %s22, 0
    %p279 = por %p277, %p278
    %p280 = scmp.ne.s32.totalorder %s266, %s267
    %p281 = scmp.eq.s32.totalorder %s23, 1
    %p282 = por %p280, %p281
    %p284 = scmp.ne.s32.totalorder %s267, %s283
    %p285 = scmp.eq.s32.totalorder %s23, 0
    %p286 = por %p284, %p285
    %p287 = scmp.le.s32.totalorder 1, %s17
    %p288 = scmp.lt.s32.totalorder %s17, 3
    %p289 = pnand %p287, %p288
    %p290 = pneg %p289
    // Predicated region
    $region9: #{tpu_custom_call.1} parent=5 // pred_check
      _
    $region10: #{tpu_custom_call.1} parent=5 // pred_check_branch
      %292 = sbr.rel (%p289) target = $region12
    $region11: #{tpu_custom_call.1} parent=5 // pred_region
      %s293 = ssub.s32 %s17, 1
      // Predicated region
      $region13: #{tpu_custom_call.1} parent=11 // pred_check
        %p294 = pneg %p64
      $region14: #{tpu_custom_call.1} parent=11 // pred_check_branch
        %296 = sbr.rel (%p294) target = $region16
      $region15: #{tpu_custom_call.1} parent=11 // pred_region
        _
      $region16: #{tpu_custom_call.1} parent=11 // pred_fallthru
        _
      // Predicated region
      $region17: #{tpu_custom_call.1} parent=11 // pred_check
        %p297 = pneg %p85
      $region18: #{tpu_custom_call.1} parent=11 // pred_check_branch
        %299 = sbr.rel (%p297) target = $region20
      $region19: #{tpu_custom_call.1} parent=11 // pred_region
        _
      $region20: #{tpu_custom_call.1} parent=11 // pred_fallthru
        _
      // Predicated region
      $region21: #{tpu_custom_call.1} parent=11 // pred_check
        %p300 = pneg %p106
      $region22: #{tpu_custom_call.1} parent=11 // pred_check_branch
        %302 = sbr.rel (%p300) target = $region24
      $region23: #{tpu_custom_call.1} parent=11 // pred_region
        _
      $region24: #{tpu_custom_call.1} parent=11 // pred_fallthru
        _
      // Predicated region
      $region25: #{tpu_custom_call.1} parent=11 // pred_check
        %p303 = pneg %p127
      $region26: #{tpu_custom_call.1} parent=11 // pred_check_branch
        %305 = sbr.rel (%p303) target = $region28
      $region27: #{tpu_custom_call.1} parent=11 // pred_region
        _
      $region28: #{tpu_custom_call.1} parent=11 // pred_fallthru
        _
      // Predicated region
      $region29: #{tpu_custom_call.1} parent=11 // pred_check
        %p306 = pneg %p148
      $region30: #{tpu_custom_call.1} parent=11 // pred_check_branch
        %308 = sbr.rel (%p306) target = $region32
      $region31: #{tpu_custom_call.1} parent=11 // pred_region
        _
      $region32: #{tpu_custom_call.1} parent=11 // pred_fallthru
        _
      // Predicated region
      $region33: #{tpu_custom_call.1} parent=11 // pred_check
        %p309 = pneg %p169
      $region34: #{tpu_custom_call.1} parent=11 // pred_check_branch
        %311 = sbr.rel (%p309) target = $region36
      $region35: #{tpu_custom_call.1} parent=11 // pred_region
        _
      $region36: #{tpu_custom_call.1} parent=11 // pred_fallthru
        _
      // Predicated region
      $region37: #{tpu_custom_call.1} parent=11 // pred_check
        %p312 = pneg %p190
      $region38: #{tpu_custom_call.1} parent=11 // pred_check_branch
        %314 = sbr.rel (%p312) target = $region40
      $region39: #{tpu_custom_call.1} parent=11 // pred_region
        _
      $region40: #{tpu_custom_call.1} parent=11 // pred_fallthru
        _
      // Predicated region
      $region41: #{tpu_custom_call.1} parent=11 // pred_check
        %p315 = pneg %p211
      $region42: #{tpu_custom_call.1} parent=11 // pred_check_branch
        %317 = sbr.rel (%p315) target = $region44
      $region43: #{tpu_custom_call.1} parent=11 // pred_region
        _
      $region44: #{tpu_custom_call.1} parent=11 // pred_fallthru
        _
      // Predicated region
      $region45: #{tpu_custom_call.1} parent=11 // pred_check
        %p318 = pneg %p232
      $region46: #{tpu_custom_call.1} parent=11 // pred_check_branch
        %320 = sbr.rel (%p318) target = $region48
      $region47: #{tpu_custom_call.1} parent=11 // pred_region
        _
      $region48: #{tpu_custom_call.1} parent=11 // pred_fallthru
        _
      // Predicated region
      $region49: #{tpu_custom_call.1} parent=11 // pred_check
        %p321 = pneg %p253
      $region50: #{tpu_custom_call.1} parent=11 // pred_check_branch
        %323 = sbr.rel (%p321) target = $region52
      $region51: #{tpu_custom_call.1} parent=11 // pred_region
        _
      $region52: #{tpu_custom_call.1} parent=11 // pred_fallthru
        _
    $region12: #{tpu_custom_call.1} parent=5 // pred_fallthru
      _
    %p324 = scmp.lt.s32.totalorder %s17, 2
    // Predicated region
    $region53: #{tpu_custom_call.1} parent=5 // pred_check
      %p325 = pneg %p324
    $region54: #{tpu_custom_call.1} parent=5 // pred_check_branch
      %327 = sbr.rel (%p325) target = $region56
    $region55: #{tpu_custom_call.1} parent=5 // pred_region
      // Predicated region
      $region57: #{tpu_custom_call.1} parent=55 // pred_check
        %p328 = pneg %p37
      $region58: #{tpu_custom_call.1} parent=55 // pred_check_branch
        %330 = sbr.rel (%p328) target = $region60
      $region59: #{tpu_custom_call.1} parent=55 // pred_region
        %s331 = smul.u32 16, %s17
        %p332 = scmp.lt.s32.totalorder %s331, 31
        %s333 = scalar_select %p332, %s331, 31
        %s334 = smul.addr %s333, 8
        %s335 = scalar_lea.vmem %s0, %s334
        %s336 = smul.u32 16, %s17
      $region60: #{tpu_custom_call.1} parent=55 // pred_fallthru
        _
    $region56: #{tpu_custom_call.1} parent=5 // pred_fallthru
      _
    %p337 = scmp.le.s32.totalorder 1, %s17
    %p338 = scmp.lt.s32.totalorder %s17, 3
    %p339 = pnand %p337, %p338
    %p340 = pneg %p339
    // Predicated region
    $region61: #{tpu_custom_call.1} parent=5 // pred_check
      _
    $region62: #{tpu_custom_call.1} parent=5 // pred_check_branch
      %342 = sbr.rel (%p339) target = $region64
    $region63: #{tpu_custom_call.1} parent=5 // pred_region
      %s343 = ssub.s32 %s17, 1
      %s344 = smul.u32 16, %s22
      %p345 = scmp.lt.s32.totalorder %s344, 31
      %s346 = scalar_select %p345, %s344, 31
      %s347 = smul.addr %s346, 8
      %s348 = scalar_lea.vmem %s0, %s347
      %p349 = pneg %p43
      %p350 = pneg %p40
      %p351 = pneg %p64
      %p352 = pneg %p61
      %p353 = pneg %p85
      %p354 = pneg %p82
      %p355 = pneg %p106
      %p356 = pneg %p103
      %p357 = pneg %p127
      %p358 = pneg %p124
      %p359 = pneg %p148
      %p360 = pneg %p145
      %p361 = pneg %p169
      %p362 = pneg %p166
      %p363 = pneg %p190
      %p364 = pneg %p187
      %p365 = pneg %p211
      %p366 = pneg %p208
      %p367 = pneg %p232
      %p368 = pneg %p229
      %p369 = pneg %p253
      %p370 = pneg %p250
      %p371 = pneg %p279
      %p372 = pneg %p276
      %s373 = smul.u32 16, %s22
      %p374 = scmp.lt.s32.totalorder %s373, 31
      %s375 = scalar_select %p374, %s373, 31
      %s376 = smul.addr %s375, 8
      %s377 = scalar_lea.vmem %s11, %s376
      %s378 = smul.u32 16, %s22
      %p379 = scmp.lt.s32.totalorder %s378, 31
      %s380 = scalar_select %p379, %s378, 31
      %s381 = smul.addr %s380, 8
      %s382 = scalar_lea.vmem %s0, %s381
      %s383 = smul.u32 16, %s22
      %s384 = smul.u32 16, %s22
      %p385 = scmp.lt.s32.totalorder %s384, 31
      %s386 = scalar_select %p385, %s384, 31
      %s387 = smul.addr %s386, 8
      %s388 = scalar_lea.vmem %s11, %s387
      %s389 = smul.u32 16, %s22
      %v391 = vld [vmem:[%s382] sm:$0xff]
      %v392 = vld [vmem:[%s382 + $0x8] sm:$0xff]
      %v393 = vld [vmem:[%s382 + $0x10] sm:$0xff]
      %v394 = vld [vmem:[%s382 + $0x18] sm:$0xff]
      %v395 = vld [vmem:[%s382 + $0x20] sm:$0xff]
      %v396 = vld [vmem:[%s382 + $0x28] sm:$0xff]
      %v397 = vld [vmem:[%s382 + $0x30] sm:$0xff]
      %v398 = vld [vmem:[%s382 + $0x38] sm:$0xff]
      %v399 = vld [vmem:[%s382 + $0x40] sm:$0xff]
      %v400 = vld [vmem:[%s382 + $0x48] sm:$0xff]
      %v401 = vld [vmem:[%s382 + $0x50] sm:$0xff]
      %v402 = vld [vmem:[%s382 + $0x58] sm:$0xff]
      %v403 = vld [vmem:[%s382 + $0x60] sm:$0xff]
      %v404 = vld [vmem:[%s382 + $0x68] sm:$0xff]
      %v405 = vld [vmem:[%s382 + $0x70] sm:$0xff]
      %v406 = vld [vmem:[%s382 + $0x78] sm:$0xff]
      %v407 = vld [vmem:[%s1] sm:$0xf]
      %v408 = vld [vmem:[%s1 + $0x4] sm:$0xf]
      %v409 = vld [vmem:[%s1 + $0x8] sm:$0xf]
      %v410 = vld [vmem:[%s1 + $0xc] sm:$0xf]
      %v411 = vld [vmem:[%s1 + $0x10] sm:$0xf]
      %v412 = vld [vmem:[%s1 + $0x14] sm:$0xf]
      %v413 = vld [vmem:[%s1 + $0x18] sm:$0xf]
      %v414 = vld [vmem:[%s1 + $0x1c] sm:$0xf]
      %v415 = vpack.c.bf16 %v392, %v391
      %v416 = vpack.c.bf16 %v394, %v393
      %v417 = vpack.c.bf16 %v396, %v395
      %v418 = vpack.c.bf16 %v398, %v397
      %v419 = vpack.c.bf16 %v400, %v399
      %v420 = vpack.c.bf16 %v402, %v401
      %v421 = vpack.c.bf16 %v404, %v403
      %v422 = vpack.c.bf16 %v406, %v405
      %v423 = vld [vmem:[%s2] sm:$0x1]
      %v425 = vlaneseq
      %v426 = vshrl.u32 %v425, 7
      %v427 = vsub.s32 0, %v426
      %v428 = vrot.slane %v423, %v427
      %v438 = vunpack.c.l.b16 %v407
      %v439 = vunpack.c.l.b16 %v408
      %v440 = vunpack.c.l.b16 %v409
      %v441 = vunpack.c.l.b16 %v410
      %v442 = vunpack.c.l.b16 %v411
      %v443 = vunpack.c.l.b16 %v412
      %v444 = vunpack.c.l.b16 %v413
      %v445 = vunpack.c.l.b16 %v414
      %v446 = vpack.c.b16 %v439, %v438
      %v447 = vpack.c.b16 %v441, %v440
      %v448 = vpack.c.b16 %v443, %v442
      %v449 = vpack.c.b16 %v445, %v444
      %vm454 = vcmask 523264
      %v456 = vsel %vm454, %v415, 0
      %v459 = vsel %vm454, %v416, 0
      %v462 = vsel %vm454, %v417, 0
      %v465 = vsel %vm454, %v418, 0
      %v468 = vsel %vm454, %v419, 0
      %v471 = vsel %vm454, %v420, 0
      %v474 = vsel %vm454, %v421, 0
      %v477 = vsel %vm454, %v422, 0
      %479 = vmatprep.subr.bf16.mxu0 0
      %480 = vmatpush1.bf16.msra.mxu0 %v446
      %481 = vmatprep.subr.bf16.mxu0 0
      %482 = vmatpush1.bf16.msra.mxu0 %v447
      %483 = vmatprep.subr.bf16.mxu0 0
      %484 = vmatpush1.bf16.msra.mxu0 %v448
      %485 = vmatprep.subr.bf16.mxu0 0
      %486 = vmatpush1.bf16.msra.mxu0 %v449
      %487 = vmatprep.subr.bf16.mxu0 0
      %488 = vmatpush1.bf16.msra.mxu0 0
      %489 = vmatprep.subr.bf16.mxu0 0
      %490 = vmatpush1.bf16.msra.mxu0 0
      %491 = vmatprep.subr.bf16.mxu0 0
      %492 = vmatpush1.bf16.msra.mxu0 0
      %493 = vmatprep.subr.bf16.mxu0 0
      %494 = vmatpush1.bf16.msra.mxu0 0
      %495 = vmatprep.subr.bf16.mxu0 0
      %496 = vmatpush1.bf16.msra.mxu0 0
      %497 = vmatprep.subr.bf16.mxu0 0
      %498 = vmatpush1.bf16.msra.mxu0 0
      %499 = vmatprep.subr.bf16.mxu0 0
      %500 = vmatpush1.bf16.msra.mxu0 0
      %501 = vmatprep.subr.bf16.mxu0 0
      %502 = vmatpush1.bf16.msra.mxu0 0
      %503 = vmatprep.subr.bf16.mxu0 0
      %504 = vmatpush1.bf16.msra.mxu0 0
      %505 = vmatprep.subr.bf16.mxu0 0
      %506 = vmatpush1.bf16.msra.mxu0 0
      %507 = vmatprep.subr.bf16.mxu0 0
      %508 = vmatpush1.bf16.msra.mxu0 0
      %509 = vmatprep.subr.bf16.mxu0 0
      %510 = vmatpush1.bf16.msra.mxu0 0
      %511 = vmatprep.mubr.bf16.mxu0 0
      %512 = vmatmul.mubr.bf16.gmra.mrb[0].mxu0 %v456
      %v513 = vpop.f32.mrb[0].mxu0
      %v514 = vadd.f32 %v428, %v513
      %v515 = vpop.f32.mrb[0].mxu0
      %v516 = vpop.f32.mrb[0].mxu0
      %v517 = vadd.f32 %v428, %v516
      %v518 = vpop.f32.mrb[0].mxu0
      %519 = vmatprep.mubr.bf16.mxu0 0
      %520 = vmatmul.mubr.bf16.gmra.mrb[0].mxu0 %v459
      %v521 = vpop.f32.mrb[0].mxu0
      %v522 = vadd.f32 %v428, %v521
      %v523 = vpop.f32.mrb[0].mxu0
      %v524 = vpop.f32.mrb[0].mxu0
      %v525 = vadd.f32 %v428, %v524
      %v526 = vpop.f32.mrb[0].mxu0
      %527 = vmatprep.mubr.bf16.mxu0 0
      %528 = vmatmul.mubr.bf16.gmra.mrb[0].mxu0 %v462
      %v529 = vpop.f32.mrb[0].mxu0
      %v530 = vadd.f32 %v428, %v529
      %v531 = vpop.f32.mrb[0].mxu0
      %v532 = vpop.f32.mrb[0].mxu0
      %v533 = vadd.f32 %v428, %v532
      %v534 = vpop.f32.mrb[0].mxu0
      %535 = vmatprep.mubr.bf16.mxu0 0
      %536 = vmatmul.mubr.bf16.gmra.mrb[0].mxu0 %v465
      %v537 = vpop.f32.mrb[0].mxu0
      %v538 = vadd.f32 %v428, %v537
      %v539 = vpop.f32.mrb[0].mxu0
      %v540 = vpop.f32.mrb[0].mxu0
      %v541 = vadd.f32 %v428, %v540
      %v542 = vpop.f32.mrb[0].mxu0
      %543 = vmatprep.mubr.bf16.mxu0 0
      %544 = vmatmul.mubr.bf16.gmra.mrb[0].mxu0 %v468
      %v545 = vpop.f32.mrb[0].mxu0
      %v546 = vadd.f32 %v428, %v545
      %v547 = vpop.f32.mrb[0].mxu0
      %v548 = vpop.f32.mrb[0].mxu0
      %v549 = vadd.f32 %v428, %v548
      %v550 = vpop.f32.mrb[0].mxu0
      %551 = vmatprep.mubr.bf16.mxu0 0
      %552 = vmatmul.mubr.bf16.gmra.mrb[0].mxu0 %v471
      %v553 = vpop.f32.mrb[0].mxu0
      %v554 = vadd.f32 %v428, %v553
      %v555 = vpop.f32.mrb[0].mxu0
      %v556 = vpop.f32.mrb[0].mxu0
      %v557 = vadd.f32 %v428, %v556
      %v558 = vpop.f32.mrb[0].mxu0
      %559 = vmatprep.mubr.bf16.mxu0 0
      %560 = vmatmul.mubr.bf16.gmra.mrb[0].mxu0 %v474
      %v561 = vpop.f32.mrb[0].mxu0
      %v562 = vadd.f32 %v428, %v561
      %v563 = vpop.f32.mrb[0].mxu0
      %v564 = vpop.f32.mrb[0].mxu0
      %v565 = vadd.f32 %v428, %v564
      %v566 = vpop.f32.mrb[0].mxu0
      %567 = vmatprep.mubr.bf16.mxu0 0
      %568 = vmatmul.mubr.bf16.gmra.mrb[0].mxu0 %v477
      %v569 = vpop.f32.mrb[0].mxu0
      %v570 = vadd.f32 %v428, %v569
      %v571 = vpop.f32.mrb[0].mxu0
      %v572 = vpop.f32.mrb[0].mxu0
      %v573 = vadd.f32 %v428, %v572
      %v574 = vpop.f32.mrb[0].mxu0
      %575 = vdwg.mxu0
      %v576 = vmax.f32 %v514, 0.0
      %v577 = vmax.f32 %v517, 0.0
      %v578 = vmax.f32 %v522, 0.0
      %v579 = vmax.f32 %v525, 0.0
      %v580 = vmax.f32 %v530, 0.0
      %v581 = vmax.f32 %v533, 0.0
      %v582 = vmax.f32 %v538, 0.0
      %v583 = vmax.f32 %v541, 0.0
      %v584 = vmax.f32 %v546, 0.0
      %v585 = vmax.f32 %v549, 0.0
      %v586 = vmax.f32 %v554, 0.0
      %v587 = vmax.f32 %v557, 0.0
      %v588 = vmax.f32 %v562, 0.0
      %v589 = vmax.f32 %v565, 0.0
      %v590 = vmax.f32 %v570, 0.0
      %v591 = vmax.f32 %v573, 0.0
      %v592 = vld [vmem:[%s3] sm:$0xf]
      %v593 = vld [vmem:[%s3 + $0x4] sm:$0xf]
      %v594 = vld [vmem:[%s3 + $0x8] sm:$0xf]
      %v595 = vld [vmem:[%s3 + $0xc] sm:$0xf]
      %v596 = vld [vmem:[%s3 + $0x10] sm:$0xf]
      %v597 = vld [vmem:[%s3 + $0x14] sm:$0xf]
      %v598 = vld [vmem:[%s3 + $0x18] sm:$0xf]
      %v599 = vld [vmem:[%s3 + $0x1c] sm:$0xf]
      %v600 = vpack.c.bf16 %v577, %v576
      %v601 = vpack.c.bf16 %v579, %v578
      %v602 = vpack.c.bf16 %v581, %v580
      %v603 = vpack.c.bf16 %v583, %v582
      %v604 = vpack.c.bf16 %v585, %v584
      %v605 = vpack.c.bf16 %v587, %v586
      %v606 = vpack.c.bf16 %v589, %v588
      %v607 = vpack.c.bf16 %v591, %v590
      %v608 = vld [vmem:[%s4] sm:$0x1]
      %v610 = vlaneseq
      %v611 = vshrl.u32 %v610, 7
      %v612 = vsub.s32 0, %v611
      %v613 = vrot.slane %v608, %v612
      %v623 = vunpack.c.l.b16 %v592
      %v624 = vunpack.c.l.b16 %v593
      %v625 = vunpack.c.l.b16 %v594
      %v626 = vunpack.c.l.b16 %v595
      %v627 = vunpack.c.l.b16 %v596
      %v628 = vunpack.c.l.b16 %v597
      %v629 = vunpack.c.l.b16 %v598
      %v630 = vunpack.c.l.b16 %v599
      %v631 = vpack.c.b16 %v624, %v623
      %v632 = vpack.c.b16 %v626, %v625
      %v633 = vpack.c.b16 %v628, %v627
      %v634 = vpack.c.b16 %v630, %v629
      %v640 = vsel %vm454, %v600, 0
      %v643 = vsel %vm454, %v601, 0
      %v646 = vsel %vm454, %v602, 0
      %v649 = vsel %vm454, %v603, 0
      %v652 = vsel %vm454, %v604, 0
      %v655 = vsel %vm454, %v605, 0
      %v658 = vsel %vm454, %v606, 0
      %v661 = vsel %vm454, %v607, 0
      %663 = vmatprep.subr.bf16.mxu0 0
      %664 = vmatpush1.bf16.msra.mxu0 %v631
      %665 = vmatprep.subr.bf16.mxu0 0
      %666 = vmatpush1.bf16.msra.mxu0 %v632
      %667 = vmatprep.subr.bf16.mxu0 0
      %668 = vmatpush1.bf16.msra.mxu0 %v633
      %669 = vmatprep.subr.bf16.mxu0 0
      %670 = vmatpush1.bf16.msra.mxu0 %v634
      %671 = vmatprep.subr.bf16.mxu0 0
      %672 = vmatpush1.bf16.msra.mxu0 0
      %673 = vmatprep.subr.bf16.mxu0 0
      %674 = vmatpush1.bf16.msra.mxu0 0
      %675 = vmatprep.subr.bf16.mxu0 0
      %676 = vmatpush1.bf16.msra.mxu0 0
      %677 = vmatprep.subr.bf16.mxu0 0
      %678 = vmatpush1.bf16.msra.mxu0 0
      %679 = vmatprep.subr.bf16.mxu0 0
      %680 = vmatpush1.bf16.msra.mxu0 0
      %681 = vmatprep.subr.bf16.mxu0 0
      %682 = vmatpush1.bf16.msra.mxu0 0
      %683 = vmatprep.subr.bf16.mxu0 0
      %684 = vmatpush1.bf16.msra.mxu0 0
      %685 = vmatprep.subr.bf16.mxu0 0
      %686 = vmatpush1.bf16.msra.mxu0 0
      %687 = vmatprep.subr.bf16.mxu0 0
      %688 = vmatpush1.bf16.msra.mxu0 0
      %689 = vmatprep.subr.bf16.mxu0 0
      %690 = vmatpush1.bf16.msra.mxu0 0
      %691 = vmatprep.subr.bf16.mxu0 0
      %692 = vmatpush1.bf16.msra.mxu0 0
      %693 = vmatprep.subr.bf16.mxu0 0
      %694 = vmatpush1.bf16.msra.mxu0 0
      %695 = vmatprep.mubr.bf16.mxu0 0
      %696 = vmatmul.mubr.bf16.gmra.mrb[0].mxu0 %v640
      %v697 = vpop.f32.mrb[0].mxu0
      %v698 = vadd.f32 %v613, %v697
      %v699 = vpop.f32.mrb[0].mxu0
      %v700 = vpop.f32.mrb[0].mxu0
      %v701 = vadd.f32 %v613, %v700
      %v702 = vpop.f32.mrb[0].mxu0
      %703 = vmatprep.mubr.bf16.mxu0 0
      %704 = vmatmul.mubr.bf16.gmra.mrb[0].mxu0 %v643
      %v705 = vpop.f32.mrb[0].mxu0
      %v706 = vadd.f32 %v613, %v705
      %v707 = vpop.f32.mrb[0].mxu0
      %v708 = vpop.f32.mrb[0].mxu0
      %v709 = vadd.f32 %v613, %v708
      %v710 = vpop.f32.mrb[0].mxu0
      %711 = vmatprep.mubr.bf16.mxu0 0
      %712 = vmatmul.mubr.bf16.gmra.mrb[0].mxu0 %v646
      %v713 = vpop.f32.mrb[0].mxu0
      %v714 = vadd.f32 %v613, %v713
      %v715 = vpop.f32.mrb[0].mxu0
      %v716 = vpop.f32.mrb[0].mxu0
      %v717 = vadd.f32 %v613, %v716
      %v718 = vpop.f32.mrb[0].mxu0
      %719 = vmatprep.mubr.bf16.mxu0 0
      %720 = vmatmul.mubr.bf16.gmra.mrb[0].mxu0 %v649
      %v721 = vpop.f32.mrb[0].mxu0
      %v722 = vadd.f32 %v613, %v721
      %v723 = vpop.f32.mrb[0].mxu0
      %v724 = vpop.f32.mrb[0].mxu0
      %v725 = vadd.f32 %v613, %v724
      %v726 = vpop.f32.mrb[0].mxu0
      %727 = vmatprep.mubr.bf16.mxu0 0
      %728 = vmatmul.mubr.bf16.gmra.mrb[0].mxu0 %v652
      %v729 = vpop.f32.mrb[0].mxu0
      %v730 = vadd.f32 %v613, %v729
      %v731 = vpop.f32.mrb[0].mxu0
      %v732 = vpop.f32.mrb[0].mxu0
      %v733 = vadd.f32 %v613, %v732
      %v734 = vpop.f32.mrb[0].mxu0
      %735 = vmatprep.mubr.bf16.mxu0 0
      %736 = vmatmul.mubr.bf16.gmra.mrb[0].mxu0 %v655
      %v737 = vpop.f32.mrb[0].mxu0
      %v738 = vadd.f32 %v613, %v737
      %v739 = vpop.f32.mrb[0].mxu0
      %v740 = vpop.f32.mrb[0].mxu0
      %v741 = vadd.f32 %v613, %v740
      %v742 = vpop.f32.mrb[0].mxu0
      %743 = vmatprep.mubr.bf16.mxu0 0
      %744 = vmatmul.mubr.bf16.gmra.mrb[0].mxu0 %v658
      %v745 = vpop.f32.mrb[0].mxu0
      %v746 = vadd.f32 %v613, %v745
      %v747 = vpop.f32.mrb[0].mxu0
      %v748 = vpop.f32.mrb[0].mxu0
      %v749 = vadd.f32 %v613, %v748
      %v750 = vpop.f32.mrb[0].mxu0
      %751 = vmatprep.mubr.bf16.mxu0 0
      %752 = vmatmul.mubr.bf16.gmra.mrb[0].mxu0 %v661
      %v753 = vpop.f32.mrb[0].mxu0
      %v754 = vadd.f32 %v613, %v753
      %v755 = vpop.f32.mrb[0].mxu0
      %v756 = vpop.f32.mrb[0].mxu0
      %v757 = vadd.f32 %v613, %v756
      %v758 = vpop.f32.mrb[0].mxu0
      %759 = vdwg.mxu0
      %v760 = vmax.f32 %v698, 0.0
      %v761 = vmax.f32 %v701, 0.0
      %v762 = vmax.f32 %v706, 0.0
      %v763 = vmax.f32 %v709, 0.0
      %v764 = vmax.f32 %v714, 0.0
      %v765 = vmax.f32 %v717, 0.0
      %v766 = vmax.f32 %v722, 0.0
      %v767 = vmax.f32 %v725, 0.0
      %v768 = vmax.f32 %v730, 0.0
      %v769 = vmax.f32 %v733, 0.0
      %v770 = vmax.f32 %v738, 0.0
      %v771 = vmax.f32 %v741, 0.0
      %v772 = vmax.f32 %v746, 0.0
      %v773 = vmax.f32 %v749, 0.0
      %v774 = vmax.f32 %v754, 0.0
      %v775 = vmax.f32 %v757, 0.0
      %v776 = vld [vmem:[%s5] sm:$0xf]
      %v777 = vld [vmem:[%s5 + $0x4] sm:$0xf]
      %v778 = vld [vmem:[%s5 + $0x8] sm:$0xf]
      %v779 = vld [vmem:[%s5 + $0xc] sm:$0xf]
      %v780 = vld [vmem:[%s5 + $0x10] sm:$0xf]
      %v781 = vld [vmem:[%s5 + $0x14] sm:$0xf]
      %v782 = vld [vmem:[%s5 + $0x18] sm:$0xf]
      %v783 = vld [vmem:[%s5 + $0x1c] sm:$0xf]
      %v784 = vpack.c.bf16 %v761, %v760
      %v785 = vpack.c.bf16 %v763, %v762
      %v786 = vpack.c.bf16 %v765, %v764
      %v787 = vpack.c.bf16 %v767, %v766
      %v788 = vpack.c.bf16 %v769, %v768
      %v789 = vpack.c.bf16 %v771, %v770
      %v790 = vpack.c.bf16 %v773, %v772
      %v791 = vpack.c.bf16 %v775, %v774
      %v792 = vld [vmem:[%s6] sm:$0x1]
      %v794 = vlaneseq
      %v795 = vshrl.u32 %v794, 7
      %v796 = vsub.s32 0, %v795
      %v797 = vrot.slane %v792, %v796
      %v807 = vunpack.c.l.b16 %v776
      %v808 = vunpack.c.l.b16 %v777
      %v809 = vunpack.c.l.b16 %v778
      %v810 = vunpack.c.l.b16 %v779
      %v811 = vunpack.c.l.b16 %v780
      %v812 = vunpack.c.l.b16 %v781
      %v813 = vunpack.c.l.b16 %v782
      %v814 = vunpack.c.l.b16 %v783
      %v815 = vpack.c.b16 %v808, %v807
      %v816 = vpack.c.b16 %v810, %v809
      %v817 = vpack.c.b16 %v812, %v811
      %v818 = vpack.c.b16 %v814, %v813
      %v824 = vsel %vm454, %v784, 0
      %v827 = vsel %vm454, %v785, 0
      %v830 = vsel %vm454, %v786, 0
      %v833 = vsel %vm454, %v787, 0
      %v836 = vsel %vm454, %v788, 0
      %v839 = vsel %vm454, %v789, 0
      %v842 = vsel %vm454, %v790, 0
      %v845 = vsel %vm454, %v791, 0
      %847 = vmatprep.subr.bf16.mxu0 0
      %848 = vmatpush1.bf16.msra.mxu0 %v815
      %849 = vmatprep.subr.bf16.mxu0 0
      %850 = vmatpush1.bf16.msra.mxu0 %v816
      %851 = vmatprep.subr.bf16.mxu0 0
      %852 = vmatpush1.bf16.msra.mxu0 %v817
      %853 = vmatprep.subr.bf16.mxu0 0
      %854 = vmatpush1.bf16.msra.mxu0 %v818
      %855 = vmatprep.subr.bf16.mxu0 0
      %856 = vmatpush1.bf16.msra.mxu0 0
      %857 = vmatprep.subr.bf16.mxu0 0
      %858 = vmatpush1.bf16.msra.mxu0 0
      %859 = vmatprep.subr.bf16.mxu0 0
      %860 = vmatpush1.bf16.msra.mxu0 0
      %861 = vmatprep.subr.bf16.mxu0 0
      %862 = vmatpush1.bf16.msra.mxu0 0
      %863 = vmatprep.subr.bf16.mxu0 0
      %864 = vmatpush1.bf16.msra.mxu0 0
      %865 = vmatprep.subr.bf16.mxu0 0
      %866 = vmatpush1.bf16.msra.mxu0 0
      %867 = vmatprep.subr.bf16.mxu0 0
      %868 = vmatpush1.bf16.msra.mxu0 0
      %869 = vmatprep.subr.bf16.mxu0 0
      %870 = vmatpush1.bf16.msra.mxu0 0
      %871 = vmatprep.subr.bf16.mxu0 0
      %872 = vmatpush1.bf16.msra.mxu0 0
      %873 = vmatprep.subr.bf16.mxu0 0
      %874 = vmatpush1.bf16.msra.mxu0 0
      %875 = vmatprep.subr.bf16.mxu0 0
      %876 = vmatpush1.bf16.msra.mxu0 0
      %877 = vmatprep.subr.bf16.mxu0 0
      %878 = vmatpush1.bf16.msra.mxu0 0
      %879 = vmatprep.mubr.bf16.mxu0 0
      %880 = vmatmul.mubr.bf16.gmra.mrb[0].mxu0 %v824
      %v881 = vpop.f32.mrb[0].mxu0
      %v882 = vadd.f32 %v797, %v881
      %v883 = vpop.f32.mrb[0].mxu0
      %v884 = vpop.f32.mrb[0].mxu0
      %v885 = vadd.f32 %v797, %v884
      %v886 = vpop.f32.mrb[0].mxu0
      %887 = vmatprep.mubr.bf16.mxu0 0
      %888 = vmatmul.mubr.bf16.gmra.mrb[0].mxu0 %v827
      %v889 = vpop.f32.mrb[0].mxu0
      %v890 = vadd.f32 %v797, %v889
      %v891 = vpop.f32.mrb[0].mxu0
      %v892 = vpop.f32.mrb[0].mxu0
      %v893 = vadd.f32 %v797, %v892
      %v894 = vpop.f32.mrb[0].mxu0
      %895 = vmatprep.mubr.bf16.mxu0 0
      %896 = vmatmul.mubr.bf16.gmra.mrb[0].mxu0 %v830
      %v897 = vpop.f32.mrb[0].mxu0
      %v898 = vadd.f32 %v797, %v897
      %v899 = vpop.f32.mrb[0].mxu0
      %v900 = vpop.f32.mrb[0].mxu0
      %v901 = vadd.f32 %v797, %v900
      %v902 = vpop.f32.mrb[0].mxu0
      %903 = vmatprep.mubr.bf16.mxu0 0
      %904 = vmatmul.mubr.bf16.gmra.mrb[0].mxu0 %v833
      %v905 = vpop.f32.mrb[0].mxu0
      %v906 = vadd.f32 %v797, %v905
      %v907 = vpop.f32.mrb[0].mxu0
      %v908 = vpop.f32.mrb[0].mxu0
      %v909 = vadd.f32 %v797, %v908
      %v910 = vpop.f32.mrb[0].mxu0
      %911 = vmatprep.mubr.bf16.mxu0 0
      %912 = vmatmul.mubr.bf16.gmra.mrb[0].mxu0 %v836
      %v913 = vpop.f32.mrb[0].mxu0
      %v914 = vadd.f32 %v797, %v913
      %v915 = vpop.f32.mrb[0].mxu0
      %v916 = vpop.f32.mrb[0].mxu0
      %v917 = vadd.f32 %v797, %v916
      %v918 = vpop.f32.mrb[0].mxu0
      %919 = vmatprep.mubr.bf16.mxu0 0
      %920 = vmatmul.mubr.bf16.gmra.mrb[0].mxu0 %v839
      %v921 = vpop.f32.mrb[0].mxu0
      %v922 = vadd.f32 %v797, %v921
      %v923 = vpop.f32.mrb[0].mxu0
      %v924 = vpop.f32.mrb[0].mxu0
      %v925 = vadd.f32 %v797, %v924
      %v926 = vpop.f32.mrb[0].mxu0
      %927 = vmatprep.mubr.bf16.mxu0 0
      %928 = vmatmul.mubr.bf16.gmra.mrb[0].mxu0 %v842
      %v929 = vpop.f32.mrb[0].mxu0
      %v930 = vadd.f32 %v797, %v929
      %v931 = vpop.f32.mrb[0].mxu0
      %v932 = vpop.f32.mrb[0].mxu0
      %v933 = vadd.f32 %v797, %v932
      %v934 = vpop.f32.mrb[0].mxu0
      %935 = vmatprep.mubr.bf16.mxu0 0
      %936 = vmatmul.mubr.bf16.gmra.mrb[0].mxu0 %v845
      %v937 = vpop.f32.mrb[0].mxu0
      %v938 = vadd.f32 %v797, %v937
      %v939 = vpop.f32.mrb[0].mxu0
      %v940 = vpop.f32.mrb[0].mxu0
      %v941 = vadd.f32 %v797, %v940
      %v942 = vpop.f32.mrb[0].mxu0
      %943 = vdwg.mxu0
      %960 = vrot.lane.b32.xlu0 %v698, 64
      %v961 = vpop.permute.xlu0 %960
      %962 = vrot.lane.b32.xlu0 %v701, 64
      %v963 = vpop.permute.xlu0 %962
      %964 = vrot.lane.b32.xlu0 %v706, 64
      %v965 = vpop.permute.xlu0 %964
      %966 = vrot.lane.b32.xlu0 %v709, 64
      %v967 = vpop.permute.xlu0 %966
      %968 = vrot.lane.b32.xlu0 %v714, 64
      %v969 = vpop.permute.xlu0 %968
      %970 = vrot.lane.b32.xlu0 %v717, 64
      %v971 = vpop.permute.xlu0 %970
      %972 = vrot.lane.b32.xlu0 %v722, 64
      %v973 = vpop.permute.xlu0 %972
      %974 = vrot.lane.b32.xlu0 %v725, 64
      %v975 = vpop.permute.xlu0 %974
      %976 = vrot.lane.b32.xlu0 %v730, 64
      %v977 = vpop.permute.xlu0 %976
      %978 = vrot.lane.b32.xlu0 %v733, 64
      %v979 = vpop.permute.xlu0 %978
      %980 = vrot.lane.b32.xlu0 %v738, 64
      %v981 = vpop.permute.xlu0 %980
      %982 = vrot.lane.b32.xlu0 %v741, 64
      %v983 = vpop.permute.xlu0 %982
      %984 = vrot.lane.b32.xlu0 %v746, 64
      %v985 = vpop.permute.xlu0 %984
      %986 = vrot.lane.b32.xlu0 %v749, 64
      %v987 = vpop.permute.xlu0 %986
      %988 = vrot.lane.b32.xlu0 %v754, 64
      %v989 = vpop.permute.xlu0 %988
      %990 = vrot.lane.b32.xlu0 %v757, 64
      %v991 = vpop.permute.xlu0 %990
      %v1008 = vadd.f32 %v882, %v961
      %v1009 = vadd.f32 %v885, %v963
      %v1010 = vadd.f32 %v890, %v965
      %v1011 = vadd.f32 %v893, %v967
      %v1012 = vadd.f32 %v898, %v969
      %v1013 = vadd.f32 %v901, %v971
      %v1014 = vadd.f32 %v906, %v973
      %v1015 = vadd.f32 %v909, %v975
      %v1016 = vadd.f32 %v914, %v977
      %v1017 = vadd.f32 %v917, %v979
      %v1018 = vadd.f32 %v922, %v981
      %v1019 = vadd.f32 %v925, %v983
      %v1020 = vadd.f32 %v930, %v985
      %v1021 = vadd.f32 %v933, %v987
      %v1022 = vadd.f32 %v938, %v989
      %v1023 = vadd.f32 %v941, %v991
      %v1024 = vmax.f32 %v1008, 0.0
      %v1025 = vmax.f32 %v1009, 0.0
      %v1026 = vmax.f32 %v1010, 0.0
      %v1027 = vmax.f32 %v1011, 0.0
      %v1028 = vmax.f32 %v1012, 0.0
      %v1029 = vmax.f32 %v1013, 0.0
      %v1030 = vmax.f32 %v1014, 0.0
      %v1031 = vmax.f32 %v1015, 0.0
      %v1032 = vmax.f32 %v1016, 0.0
      %v1033 = vmax.f32 %v1017, 0.0
      %v1034 = vmax.f32 %v1018, 0.0
      %v1035 = vmax.f32 %v1019, 0.0
      %v1036 = vmax.f32 %v1020, 0.0
      %v1037 = vmax.f32 %v1021, 0.0
      %v1038 = vmax.f32 %v1022, 0.0
      %v1039 = vmax.f32 %v1023, 0.0
      %v1040 = vld [vmem:[%s7] sm:$0xf]
      %v1041 = vld [vmem:[%s7 + $0x4] sm:$0xf]
      %v1042 = vld [vmem:[%s7 + $0x8] sm:$0xf]
      %v1043 = vld [vmem:[%s7 + $0xc] sm:$0xf]
      %v1044 = vld [vmem:[%s7 + $0x10] sm:$0xf]
      %v1045 = vld [vmem:[%s7 + $0x14] sm:$0xf]
      %v1046 = vld [vmem:[%s7 + $0x18] sm:$0xf]
      %v1047 = vld [vmem:[%s7 + $0x1c] sm:$0xf]
      %v1048 = vpack.c.bf16 %v1025, %v1024
      %v1049 = vpack.c.bf16 %v1027, %v1026
      %v1050 = vpack.c.bf16 %v1029, %v1028
      %v1051 = vpack.c.bf16 %v1031, %v1030
      %v1052 = vpack.c.bf16 %v1033, %v1032
      %v1053 = vpack.c.bf16 %v1035, %v1034
      %v1054 = vpack.c.bf16 %v1037, %v1036
      %v1055 = vpack.c.bf16 %v1039, %v1038
      %v1056 = vld [vmem:[%s8] sm:$0x1]
      %v1058 = vlaneseq
      %v1059 = vshrl.u32 %v1058, 7
      %v1060 = vsub.s32 0, %v1059
      %v1061 = vrot.slane %v1056, %v1060
      %v1071 = vunpack.c.l.b16 %v1040
      %v1072 = vunpack.c.l.b16 %v1041
      %v1073 = vunpack.c.l.b16 %v1042
      %v1074 = vunpack.c.l.b16 %v1043
      %v1075 = vunpack.c.l.b16 %v1044
      %v1076 = vunpack.c.l.b16 %v1045
      %v1077 = vunpack.c.l.b16 %v1046
      %v1078 = vunpack.c.l.b16 %v1047
      %v1079 = vpack.c.b16 %v1072, %v1071
      %v1080 = vpack.c.b16 %v1074, %v1073
      %v1081 = vpack.c.b16 %v1076, %v1075
      %v1082 = vpack.c.b16 %v1078, %v1077
      %v1088 = vsel %vm454, %v1048, 0
      %v1091 = vsel %vm454, %v1049, 0
      %v1094 = vsel %vm454, %v1050, 0
      %v1097 = vsel %vm454, %v1051, 0
      %v1100 = vsel %vm454, %v1052, 0
      %v1103 = vsel %vm454, %v1053, 0
      %v1106 = vsel %vm454, %v1054, 0
      %v1109 = vsel %vm454, %v1055, 0
      %1111 = vmatprep.subr.bf16.mxu0 0
      %1112 = vmatpush1.bf16.msra.mxu0 %v1079
      %1113 = vmatprep.subr.bf16.mxu0 0
      %1114 = vmatpush1.bf16.msra.mxu0 %v1080
      %1115 = vmatprep.subr.bf16.mxu0 0
      %1116 = vmatpush1.bf16.msra.mxu0 %v1081
      %1117 = vmatprep.subr.bf16.mxu0 0
      %1118 = vmatpush1.bf16.msra.mxu0 %v1082
      %1119 = vmatprep.subr.bf16.mxu0 0
      %1120 = vmatpush1.bf16.msra.mxu0 0
      %1121 = vmatprep.subr.bf16.mxu0 0
      %1122 = vmatpush1.bf16.msra.mxu0 0
      %1123 = vmatprep.subr.bf16.mxu0 0
      %1124 = vmatpush1.bf16.msra.mxu0 0
      %1125 = vmatprep.subr.bf16.mxu0 0
      %1126 = vmatpush1.bf16.msra.mxu0 0
      %1127 = vmatprep.subr.bf16.mxu0 0
      %1128 = vmatpush1.bf16.msra.mxu0 0
      %1129 = vmatprep.subr.bf16.mxu0 0
      %1130 = vmatpush1.bf16.msra.mxu0 0
      %1131 = vmatprep.subr.bf16.mxu0 0
      %1132 = vmatpush1.bf16.msra.mxu0 0
      %1133 = vmatprep.subr.bf16.mxu0 0
      %1134 = vmatpush1.bf16.msra.mxu0 0
      %1135 = vmatprep.subr.bf16.mxu0 0
      %1136 = vmatpush1.bf16.msra.mxu0 0
      %1137 = vmatprep.subr.bf16.mxu0 0
      %1138 = vmatpush1.bf16.msra.mxu0 0
      %1139 = vmatprep.subr.bf16.mxu0 0
      %1140 = vmatpush1.bf16.msra.mxu0 0
      %1141 = vmatprep.subr.bf16.mxu0 0
      %1142 = vmatpush1.bf16.msra.mxu0 0
      %1143 = vmatprep.mubr.bf16.mxu0 0
      %1144 = vmatmul.mubr.bf16.gmra.mrb[0].mxu0 %v1088
      %v1145 = vpop.f32.mrb[0].mxu0
      %v1146 = vadd.f32 %v1061, %v1145
      %v1147 = vpop.f32.mrb[0].mxu0
      %v1148 = vpop.f32.mrb[0].mxu0
      %v1149 = vadd.f32 %v1061, %v1148
      %v1150 = vpop.f32.mrb[0].mxu0
      %1151 = vmatprep.mubr.bf16.mxu0 0
      %1152 = vmatmul.mubr.bf16.gmra.mrb[0].mxu0 %v1091
      %v1153 = vpop.f32.mrb[0].mxu0
      %v1154 = vadd.f32 %v1061, %v1153
      %v1155 = vpop.f32.mrb[0].mxu0
      %v1156 = vpop.f32.mrb[0].mxu0
      %v1157 = vadd.f32 %v1061, %v1156
      %v1158 = vpop.f32.mrb[0].mxu0
      %1159 = vmatprep.mubr.bf16.mxu0 0
      %1160 = vmatmul.mubr.bf16.gmra.mrb[0].mxu0 %v1094
      %v1161 = vpop.f32.mrb[0].mxu0
      %v1162 = vadd.f32 %v1061, %v1161
      %v1163 = vpop.f32.mrb[0].mxu0
      %v1164 = vpop.f32.mrb[0].mxu0
      %v1165 = vadd.f32 %v1061, %v1164
      %v1166 = vpop.f32.mrb[0].mxu0
      %1167 = vmatprep.mubr.bf16.mxu0 0
      %1168 = vmatmul.mubr.bf16.gmra.mrb[0].mxu0 %v1097
      %v1169 = vpop.f32.mrb[0].mxu0
      %v1170 = vadd.f32 %v1061, %v1169
      %v1171 = vpop.f32.mrb[0].mxu0
      %v1172 = vpop.f32.mrb[0].mxu0
      %v1173 = vadd.f32 %v1061, %v1172
      %v1174 = vpop.f32.mrb[0].mxu0
      %1175 = vmatprep.mubr.bf16.mxu0 0
      %1176 = vmatmul.mubr.bf16.gmra.mrb[0].mxu0 %v1100
      %v1177 = vpop.f32.mrb[0].mxu0
      %v1178 = vadd.f32 %v1061, %v1177
      %v1179 = vpop.f32.mrb[0].mxu0
      %v1180 = vpop.f32.mrb[0].mxu0
      %v1181 = vadd.f32 %v1061, %v1180
      %v1182 = vpop.f32.mrb[0].mxu0
      %1183 = vmatprep.mubr.bf16.mxu0 0
      %1184 = vmatmul.mubr.bf16.gmra.mrb[0].mxu0 %v1103
      %v1185 = vpop.f32.mrb[0].mxu0
      %v1186 = vadd.f32 %v1061, %v1185
      %v1187 = vpop.f32.mrb[0].mxu0
      %v1188 = vpop.f32.mrb[0].mxu0
      %v1189 = vadd.f32 %v1061, %v1188
      %v1190 = vpop.f32.mrb[0].mxu0
      %1191 = vmatprep.mubr.bf16.mxu0 0
      %1192 = vmatmul.mubr.bf16.gmra.mrb[0].mxu0 %v1106
      %v1193 = vpop.f32.mrb[0].mxu0
      %v1194 = vadd.f32 %v1061, %v1193
      %v1195 = vpop.f32.mrb[0].mxu0
      %v1196 = vpop.f32.mrb[0].mxu0
      %v1197 = vadd.f32 %v1061, %v1196
      %v1198 = vpop.f32.mrb[0].mxu0
      %1199 = vmatprep.mubr.bf16.mxu0 0
      %1200 = vmatmul.mubr.bf16.gmra.mrb[0].mxu0 %v1109
      %v1201 = vpop.f32.mrb[0].mxu0
      %v1202 = vadd.f32 %v1061, %v1201
      %v1203 = vpop.f32.mrb[0].mxu0
      %v1204 = vpop.f32.mrb[0].mxu0
      %v1205 = vadd.f32 %v1061, %v1204
      %v1206 = vpop.f32.mrb[0].mxu0
      %1207 = vdwg.mxu0
      %1224 = vrot.lane.b32.xlu0 %v882, 64
      %v1225 = vpop.permute.xlu0 %1224
      %1226 = vrot.lane.b32.xlu0 %v885, 64
      %v1227 = vpop.permute.xlu0 %1226
      %1228 = vrot.lane.b32.xlu0 %v890, 64
      %v1229 = vpop.permute.xlu0 %1228
      %1230 = vrot.lane.b32.xlu0 %v893, 64
      %v1231 = vpop.permute.xlu0 %1230
      %1232 = vrot.lane.b32.xlu0 %v898, 64
      %v1233 = vpop.permute.xlu0 %1232
      %1234 = vrot.lane.b32.xlu0 %v901, 64
      %v1235 = vpop.permute.xlu0 %1234
      %1236 = vrot.lane.b32.xlu0 %v906, 64
      %v1237 = vpop.permute.xlu0 %1236
      %1238 = vrot.lane.b32.xlu0 %v909, 64
      %v1239 = vpop.permute.xlu0 %1238
      %1240 = vrot.lane.b32.xlu0 %v914, 64
      %v1241 = vpop.permute.xlu0 %1240
      %1242 = vrot.lane.b32.xlu0 %v917, 64
      %v1243 = vpop.permute.xlu0 %1242
      %1244 = vrot.lane.b32.xlu0 %v922, 64
      %v1245 = vpop.permute.xlu0 %1244
      %1246 = vrot.lane.b32.xlu0 %v925, 64
      %v1247 = vpop.permute.xlu0 %1246
      %1248 = vrot.lane.b32.xlu0 %v930, 64
      %v1249 = vpop.permute.xlu0 %1248
      %1250 = vrot.lane.b32.xlu0 %v933, 64
      %v1251 = vpop.permute.xlu0 %1250
      %1252 = vrot.lane.b32.xlu0 %v938, 64
      %v1253 = vpop.permute.xlu0 %1252
      %1254 = vrot.lane.b32.xlu0 %v941, 64
      %v1255 = vpop.permute.xlu0 %1254
      %v1272 = vadd.f32 %v1146, %v1225
      %v1273 = vadd.f32 %v1149, %v1227
      %v1274 = vadd.f32 %v1154, %v1229
      %v1275 = vadd.f32 %v1157, %v1231
      %v1276 = vadd.f32 %v1162, %v1233
      %v1277 = vadd.f32 %v1165, %v1235
      %v1278 = vadd.f32 %v1170, %v1237
      %v1279 = vadd.f32 %v1173, %v1239
      %v1280 = vadd.f32 %v1178, %v1241
      %v1281 = vadd.f32 %v1181, %v1243
      %v1282 = vadd.f32 %v1186, %v1245
      %v1283 = vadd.f32 %v1189, %v1247
      %v1284 = vadd.f32 %v1194, %v1249
      %v1285 = vadd.f32 %v1197, %v1251
      %v1286 = vadd.f32 %v1202, %v1253
      %v1287 = vadd.f32 %v1205, %v1255
      %v1288 = vmax.f32 %v1272, 0.0
      %v1289 = vmax.f32 %v1273, 0.0
      %v1290 = vmax.f32 %v1274, 0.0
      %v1291 = vmax.f32 %v1275, 0.0
      %v1292 = vmax.f32 %v1276, 0.0
      %v1293 = vmax.f32 %v1277, 0.0
      %v1294 = vmax.f32 %v1278, 0.0
      %v1295 = vmax.f32 %v1279, 0.0
      %v1296 = vmax.f32 %v1280, 0.0
      %v1297 = vmax.f32 %v1281, 0.0
      %v1298 = vmax.f32 %v1282, 0.0
      %v1299 = vmax.f32 %v1283, 0.0
      %v1300 = vmax.f32 %v1284, 0.0
      %v1301 = vmax.f32 %v1285, 0.0
      %v1302 = vmax.f32 %v1286, 0.0
      %v1303 = vmax.f32 %v1287, 0.0
      %v1304 = vld [vmem:[%s9] sm:$0xf]
      %v1305 = vld [vmem:[%s9 + $0x4] sm:$0xf]
      %v1306 = vld [vmem:[%s9 + $0x8] sm:$0xf]
      %v1307 = vld [vmem:[%s9 + $0xc] sm:$0xf]
      %v1308 = vld [vmem:[%s9 + $0x10] sm:$0xf]
      %v1309 = vld [vmem:[%s9 + $0x14] sm:$0xf]
      %v1310 = vld [vmem:[%s9 + $0x18] sm:$0xf]
      %v1311 = vld [vmem:[%s9 + $0x1c] sm:$0xf]
      %v1312 = vpack.c.bf16 %v1289, %v1288
      %v1313 = vpack.c.bf16 %v1291, %v1290
      %v1314 = vpack.c.bf16 %v1293, %v1292
      %v1315 = vpack.c.bf16 %v1295, %v1294
      %v1316 = vpack.c.bf16 %v1297, %v1296
      %v1317 = vpack.c.bf16 %v1299, %v1298
      %v1318 = vpack.c.bf16 %v1301, %v1300
      %v1319 = vpack.c.bf16 %v1303, %v1302
      %v1320 = vld [vmem:[%s10] sm:$0x1]
      %v1322 = vlaneseq
      %v1323 = vshrl.u32 %v1322, 7
      %v1324 = vsub.s32 0, %v1323
      %v1325 = vrot.slane %v1320, %v1324
      %v1335 = vunpack.c.l.b16 %v1304
      %v1336 = vunpack.c.l.b16 %v1305
      %v1337 = vunpack.c.l.b16 %v1306
      %v1338 = vunpack.c.l.b16 %v1307
      %v1339 = vunpack.c.l.b16 %v1308
      %v1340 = vunpack.c.l.b16 %v1309
      %v1341 = vunpack.c.l.b16 %v1310
      %v1342 = vunpack.c.l.b16 %v1311
      %v1343 = vpack.c.b16 %v1336, %v1335
      %v1344 = vpack.c.b16 %v1338, %v1337
      %v1345 = vpack.c.b16 %v1340, %v1339
      %v1346 = vpack.c.b16 %v1342, %v1341
      %v1352 = vsel %vm454, %v1312, 0
      %v1355 = vsel %vm454, %v1313, 0
      %v1358 = vsel %vm454, %v1314, 0
      %v1361 = vsel %vm454, %v1315, 0
      %v1364 = vsel %vm454, %v1316, 0
      %v1367 = vsel %vm454, %v1317, 0
      %v1370 = vsel %vm454, %v1318, 0
      %v1373 = vsel %vm454, %v1319, 0
      %1375 = vmatprep.subr.bf16.mxu0 0
      %1376 = vmatpush1.bf16.msra.mxu0 %v1343
      %1377 = vmatprep.subr.bf16.mxu0 0
      %1378 = vmatpush1.bf16.msra.mxu0 %v1344
      %1379 = vmatprep.subr.bf16.mxu0 0
      %1380 = vmatpush1.bf16.msra.mxu0 %v1345
      %1381 = vmatprep.subr.bf16.mxu0 0
      %1382 = vmatpush1.bf16.msra.mxu0 %v1346
      %1383 = vmatprep.subr.bf16.mxu0 0
      %1384 = vmatpush1.bf16.msra.mxu0 0
      %1385 = vmatprep.subr.bf16.mxu0 0
      %1386 = vmatpush1.bf16.msra.mxu0 0
      %1387 = vmatprep.subr.bf16.mxu0 0
      %1388 = vmatpush1.bf16.msra.mxu0 0
      %1389 = vmatprep.subr.bf16.mxu0 0
      %1390 = vmatpush1.bf16.msra.mxu0 0
      %1391 = vmatprep.subr.bf16.mxu0 0
      %1392 = vmatpush1.bf16.msra.mxu0 0
      %1393 = vmatprep.subr.bf16.mxu0 0
      %1394 = vmatpush1.bf16.msra.mxu0 0
      %1395 = vmatprep.subr.bf16.mxu0 0
      %1396 = vmatpush1.bf16.msra.mxu0 0
      %1397 = vmatprep.subr.bf16.mxu0 0
      %1398 = vmatpush1.bf16.msra.mxu0 0
      %1399 = vmatprep.subr.bf16.mxu0 0
      %1400 = vmatpush1.bf16.msra.mxu0 0
      %1401 = vmatprep.subr.bf16.mxu0 0
      %1402 = vmatpush1.bf16.msra.mxu0 0
      %1403 = vmatprep.subr.bf16.mxu0 0
      %1404 = vmatpush1.bf16.msra.mxu0 0
      %1405 = vmatprep.subr.bf16.mxu0 0
      %1406 = vmatpush1.bf16.msra.mxu0 0
      %1407 = vmatprep.mubr.bf16.mxu0 0
      %1408 = vmatmul.mubr.bf16.gmra.mrb[0].mxu0 %v1352
      %v1409 = vpop.f32.mrb[0].mxu0
      %v1410 = vadd.f32 %v1325, %v1409
      %v1411 = vpop.f32.mrb[0].mxu0
      %v1412 = vpop.f32.mrb[0].mxu0
      %v1413 = vadd.f32 %v1325, %v1412
      %v1414 = vpop.f32.mrb[0].mxu0
      %1415 = vmatprep.mubr.bf16.mxu0 0
      %1416 = vmatmul.mubr.bf16.gmra.mrb[0].mxu0 %v1355
      %v1417 = vpop.f32.mrb[0].mxu0
      %v1418 = vadd.f32 %v1325, %v1417
      %v1419 = vpop.f32.mrb[0].mxu0
      %v1420 = vpop.f32.mrb[0].mxu0
      %v1421 = vadd.f32 %v1325, %v1420
      %v1422 = vpop.f32.mrb[0].mxu0
      %1423 = vmatprep.mubr.bf16.mxu0 0
      %1424 = vmatmul.mubr.bf16.gmra.mrb[0].mxu0 %v1358
      %v1425 = vpop.f32.mrb[0].mxu0
      %v1426 = vadd.f32 %v1325, %v1425
      %v1427 = vpop.f32.mrb[0].mxu0
      %v1428 = vpop.f32.mrb[0].mxu0
      %v1429 = vadd.f32 %v1325, %v1428
      %v1430 = vpop.f32.mrb[0].mxu0
      %1431 = vmatprep.mubr.bf16.mxu0 0
      %1432 = vmatmul.mubr.bf16.gmra.mrb[0].mxu0 %v1361
      %v1433 = vpop.f32.mrb[0].mxu0
      %v1434 = vadd.f32 %v1325, %v1433
      %v1435 = vpop.f32.mrb[0].mxu0
      %v1436 = vpop.f32.mrb[0].mxu0
      %v1437 = vadd.f32 %v1325, %v1436
      %v1438 = vpop.f32.mrb[0].mxu0
      %1439 = vmatprep.mubr.bf16.mxu0 0
      %1440 = vmatmul.mubr.bf16.gmra.mrb[0].mxu0 %v1364
      %v1441 = vpop.f32.mrb[0].mxu0
      %v1442 = vadd.f32 %v1325, %v1441
      %v1443 = vpop.f32.mrb[0].mxu0
      %v1444 = vpop.f32.mrb[0].mxu0
      %v1445 = vadd.f32 %v1325, %v1444
      %v1446 = vpop.f32.mrb[0].mxu0
      %1447 = vmatprep.mubr.bf16.mxu0 0
      %1448 = vmatmul.mubr.bf16.gmra.mrb[0].mxu0 %v1367
      %v1449 = vpop.f32.mrb[0].mxu0
      %v1450 = vadd.f32 %v1325, %v1449
      %v1451 = vpop.f32.mrb[0].mxu0
      %v1452 = vpop.f32.mrb[0].mxu0
      %v1453 = vadd.f32 %v1325, %v1452
      %v1454 = vpop.f32.mrb[0].mxu0
      %1455 = vmatprep.mubr.bf16.mxu0 0
      %1456 = vmatmul.mubr.bf16.gmra.mrb[0].mxu0 %v1370
      %v1457 = vpop.f32.mrb[0].mxu0
      %v1458 = vadd.f32 %v1325, %v1457
      %v1459 = vpop.f32.mrb[0].mxu0
      %v1460 = vpop.f32.mrb[0].mxu0
      %v1461 = vadd.f32 %v1325, %v1460
      %v1462 = vpop.f32.mrb[0].mxu0
      %1463 = vmatprep.mubr.bf16.mxu0 0
      %1464 = vmatmul.mubr.bf16.gmra.mrb[0].mxu0 %v1373
      %v1465 = vpop.f32.mrb[0].mxu0
      %v1466 = vadd.f32 %v1325, %v1465
      %v1467 = vpop.f32.mrb[0].mxu0
      %v1468 = vpop.f32.mrb[0].mxu0
      %v1469 = vadd.f32 %v1325, %v1468
      %v1470 = vpop.f32.mrb[0].mxu0
      %1471 = vdwg.mxu0
      %vm1472 = vcmask 261120
      %v1473 = vsel %vm1472, %v1410, -inf
      %1474 = vmax.xlane.f32.xlu0 %v1473
      %v1475 = vpop.xlane.xlu0 %1474
      %v1476 = vsel %vm1472, %v1413, -inf
      %1477 = vmax.xlane.f32.xlu0 %v1476
      %v1478 = vpop.xlane.xlu0 %1477
      %v1479 = vsel %vm1472, %v1418, -inf
      %1480 = vmax.xlane.f32.xlu0 %v1479
      %v1481 = vpop.xlane.xlu0 %1480
      %v1482 = vsel %vm1472, %v1421, -inf
      %1483 = vmax.xlane.f32.xlu0 %v1482
      %v1484 = vpop.xlane.xlu0 %1483
      %v1485 = vsel %vm1472, %v1426, -inf
      %1486 = vmax.xlane.f32.xlu0 %v1485
      %v1487 = vpop.xlane.xlu0 %1486
      %v1488 = vsel %vm1472, %v1429, -inf
      %1489 = vmax.xlane.f32.xlu0 %v1488
      %v1490 = vpop.xlane.xlu0 %1489
      %v1491 = vsel %vm1472, %v1434, -inf
      %1492 = vmax.xlane.f32.xlu0 %v1491
      %v1493 = vpop.xlane.xlu0 %1492
      %v1494 = vsel %vm1472, %v1437, -inf
      %1495 = vmax.xlane.f32.xlu0 %v1494
      %v1496 = vpop.xlane.xlu0 %1495
      %v1497 = vsel %vm1472, %v1442, -inf
      %1498 = vmax.xlane.f32.xlu0 %v1497
      %v1499 = vpop.xlane.xlu0 %1498
      %v1500 = vsel %vm1472, %v1445, -inf
      %1501 = vmax.xlane.f32.xlu0 %v1500
      %v1502 = vpop.xlane.xlu0 %1501
      %v1503 = vsel %vm1472, %v1450, -inf
      %1504 = vmax.xlane.f32.xlu0 %v1503
      %v1505 = vpop.xlane.xlu0 %1504
      %v1506 = vsel %vm1472, %v1453, -inf
      %1507 = vmax.xlane.f32.xlu0 %v1506
      %v1508 = vpop.xlane.xlu0 %1507
      %v1509 = vsel %vm1472, %v1458, -inf
      %1510 = vmax.xlane.f32.xlu0 %v1509
      %v1511 = vpop.xlane.xlu0 %1510
      %v1512 = vsel %vm1472, %v1461, -inf
      %1513 = vmax.xlane.f32.xlu0 %v1512
      %v1514 = vpop.xlane.xlu0 %1513
      %v1515 = vsel %vm1472, %v1466, -inf
      %1516 = vmax.xlane.f32.xlu0 %v1515
      %v1517 = vpop.xlane.xlu0 %1516
      %v1518 = vsel %vm1472, %v1469, -inf
      %1519 = vmax.xlane.f32.xlu0 %v1518
      %v1520 = vpop.xlane.xlu0 %1519
      %v1521 = vsub.f32 %v1410, %v1475
      %v1522 = vsub.f32 %v1413, %v1478
      %v1523 = vsub.f32 %v1418, %v1481
      %v1524 = vsub.f32 %v1421, %v1484
      %v1525 = vsub.f32 %v1426, %v1487
      %v1526 = vsub.f32 %v1429, %v1490
      %v1527 = vsub.f32 %v1434, %v1493
      %v1528 = vsub.f32 %v1437, %v1496
      %v1529 = vsub.f32 %v1442, %v1499
      %v1530 = vsub.f32 %v1445, %v1502
      %v1531 = vsub.f32 %v1450, %v1505
      %v1532 = vsub.f32 %v1453, %v1508
      %v1533 = vsub.f32 %v1458, %v1511
      %v1534 = vsub.f32 %v1461, %v1514
      %v1535 = vsub.f32 %v1466, %v1517
      %v1536 = vsub.f32 %v1469, %v1520
      %v1537 = vmul.f32 %v1521, 1.442695
      %v1538 = vpow.pop %v1537
      %v1539 = vmul.f32 %v1522, 1.442695
      %v1540 = vpow.pop %v1539
      %v1541 = vmul.f32 %v1523, 1.442695
      %v1542 = vpow.pop %v1541
      %v1543 = vmul.f32 %v1524, 1.442695
      %v1544 = vpow.pop %v1543
      %v1545 = vmul.f32 %v1525, 1.442695
      %v1546 = vpow.pop %v1545
      %v1547 = vmul.f32 %v1526, 1.442695
      %v1548 = vpow.pop %v1547
      %v1549 = vmul.f32 %v1527, 1.442695
      %v1550 = vpow.pop %v1549
      %v1551 = vmul.f32 %v1528, 1.442695
      %v1552 = vpow.pop %v1551
      %v1553 = vmul.f32 %v1529, 1.442695
      %v1554 = vpow.pop %v1553
      %v1555 = vmul.f32 %v1530, 1.442695
      %v1556 = vpow.pop %v1555
      %v1557 = vmul.f32 %v1531, 1.442695
      %v1558 = vpow.pop %v1557
      %v1559 = vmul.f32 %v1532, 1.442695
      %v1560 = vpow.pop %v1559
      %v1561 = vmul.f32 %v1533, 1.442695
      %v1562 = vpow.pop %v1561
      %v1563 = vmul.f32 %v1534, 1.442695
      %v1564 = vpow.pop %v1563
      %v1565 = vmul.f32 %v1535, 1.442695
      %v1566 = vpow.pop %v1565
      %v1567 = vmul.f32 %v1536, 1.442695
      %v1568 = vpow.pop %v1567
      %v1569 = vsel %vm1472, %v1538, 0.0
      %1570 = vadd.xlane.f32.xlu0 %v1569
      %v1571 = vpop.xlane.xlu0 %1570
      %v1572 = vsel %vm1472, %v1540, 0.0
      %1573 = vadd.xlane.f32.xlu0 %v1572
      %v1574 = vpop.xlane.xlu0 %1573
      %v1575 = vsel %vm1472, %v1542, 0.0
      %1576 = vadd.xlane.f32.xlu0 %v1575
      %v1577 = vpop.xlane.xlu0 %1576
      %v1578 = vsel %vm1472, %v1544, 0.0
      %1579 = vadd.xlane.f32.xlu0 %v1578
      %v1580 = vpop.xlane.xlu0 %1579
      %v1581 = vsel %vm1472, %v1546, 0.0
      %1582 = vadd.xlane.f32.xlu0 %v1581
      %v1583 = vpop.xlane.xlu0 %1582
      %v1584 = vsel %vm1472, %v1548, 0.0
      %1585 = vadd.xlane.f32.xlu0 %v1584
      %v1586 = vpop.xlane.xlu0 %1585
      %v1587 = vsel %vm1472, %v1550, 0.0
      %1588 = vadd.xlane.f32.xlu0 %v1587
      %v1589 = vpop.xlane.xlu0 %1588
      %v1590 = vsel %vm1472, %v1552, 0.0
      %1591 = vadd.xlane.f32.xlu0 %v1590
      %v1592 = vpop.xlane.xlu0 %1591
      %v1593 = vsel %vm1472, %v1554, 0.0
      %1594 = vadd.xlane.f32.xlu0 %v1593
      %v1595 = vpop.xlane.xlu0 %1594
      %v1596 = vsel %vm1472, %v1556, 0.0
      %1597 = vadd.xlane.f32.xlu0 %v1596
      %v1598 = vpop.xlane.xlu0 %1597
      %v1599 = vsel %vm1472, %v1558, 0.0
      %1600 = vadd.xlane.f32.xlu0 %v1599
      %v1601 = vpop.xlane.xlu0 %1600
      %v1602 = vsel %vm1472, %v1560, 0.0
      %1603 = vadd.xlane.f32.xlu0 %v1602
      %v1604 = vpop.xlane.xlu0 %1603
      %v1605 = vsel %vm1472, %v1562, 0.0
      %1606 = vadd.xlane.f32.xlu0 %v1605
      %v1607 = vpop.xlane.xlu0 %1606
      %v1608 = vsel %vm1472, %v1564, 0.0
      %1609 = vadd.xlane.f32.xlu0 %v1608
      %v1610 = vpop.xlane.xlu0 %1609
      %v1611 = vsel %vm1472, %v1566, 0.0
      %1612 = vadd.xlane.f32.xlu0 %v1611
      %v1613 = vpop.xlane.xlu0 %1612
      %v1614 = vsel %vm1472, %v1568, 0.0
      %1615 = vadd.xlane.f32.xlu0 %v1614
      %v1616 = vpop.xlane.xlu0 %1615
      %v1617 = vlog2.pop %v1571
      %v1618 = vmul.f32 %v1617, 0.6931472
      %v1619 = vlog2.pop %v1574
      %v1620 = vmul.f32 %v1619, 0.6931472
      %v1621 = vlog2.pop %v1577
      %v1622 = vmul.f32 %v1621, 0.6931472
      %v1623 = vlog2.pop %v1580
      %v1624 = vmul.f32 %v1623, 0.6931472
      %v1625 = vlog2.pop %v1583
      %v1626 = vmul.f32 %v1625, 0.6931472
      %v1627 = vlog2.pop %v1586
      %v1628 = vmul.f32 %v1627, 0.6931472
      %v1629 = vlog2.pop %v1589
      %v1630 = vmul.f32 %v1629, 0.6931472
      %v1631 = vlog2.pop %v1592
      %v1632 = vmul.f32 %v1631, 0.6931472
      %v1633 = vlog2.pop %v1595
      %v1634 = vmul.f32 %v1633, 0.6931472
      %v1635 = vlog2.pop %v1598
      %v1636 = vmul.f32 %v1635, 0.6931472
      %v1637 = vlog2.pop %v1601
      %v1638 = vmul.f32 %v1637, 0.6931472
      %v1639 = vlog2.pop %v1604
      %v1640 = vmul.f32 %v1639, 0.6931472
      %v1641 = vlog2.pop %v1607
      %v1642 = vmul.f32 %v1641, 0.6931472
      %v1643 = vlog2.pop %v1610
      %v1644 = vmul.f32 %v1643, 0.6931472
      %v1645 = vlog2.pop %v1613
      %v1646 = vmul.f32 %v1645, 0.6931472
      %v1647 = vlog2.pop %v1616
      %v1648 = vmul.f32 %v1647, 0.6931472
      %v1649 = vsub.f32 %v1521, %v1618
      %v1650 = vsub.f32 %v1522, %v1620
      %v1651 = vsub.f32 %v1523, %v1622
      %v1652 = vsub.f32 %v1524, %v1624
      %v1653 = vsub.f32 %v1525, %v1626
      %v1654 = vsub.f32 %v1526, %v1628
      %v1655 = vsub.f32 %v1527, %v1630
      %v1656 = vsub.f32 %v1528, %v1632
      %v1657 = vsub.f32 %v1529, %v1634
      %v1658 = vsub.f32 %v1530, %v1636
      %v1659 = vsub.f32 %v1531, %v1638
      %v1660 = vsub.f32 %v1532, %v1640
      %v1661 = vsub.f32 %v1533, %v1642
      %v1662 = vsub.f32 %v1534, %v1644
      %v1663 = vsub.f32 %v1535, %v1646
      %v1664 = vsub.f32 %v1536, %v1648
      %1665 = vst.msk [vmem:[%s388] sm:$0xff] %vm1472, %v1649
      %1666 = vst.msk [vmem:[%s388 + $0x8] sm:$0xff] %vm1472, %v1650
      %1667 = vst.msk [vmem:[%s388 + $0x10] sm:$0xff] %vm1472, %v1651
      %1668 = vst.msk [vmem:[%s388 + $0x18] sm:$0xff] %vm1472, %v1652
      %1669 = vst.msk [vmem:[%s388 + $0x20] sm:$0xff] %vm1472, %v1653
      %1670 = vst.msk [vmem:[%s388 + $0x28] sm:$0xff] %vm1472, %v1654
      %1671 = vst.msk [vmem:[%s388 + $0x30] sm:$0xff] %vm1472, %v1655
      %1672 = vst.msk [vmem:[%s388 + $0x38] sm:$0xff] %vm1472, %v1656
      %1673 = vst.msk [vmem:[%s388 + $0x40] sm:$0xff] %vm1472, %v1657
      %1674 = vst.msk [vmem:[%s388 + $0x48] sm:$0xff] %vm1472, %v1658
      %1675 = vst.msk [vmem:[%s388 + $0x50] sm:$0xff] %vm1472, %v1659
      %1676 = vst.msk [vmem:[%s388 + $0x58] sm:$0xff] %vm1472, %v1660
      %1677 = vst.msk [vmem:[%s388 + $0x60] sm:$0xff] %vm1472, %v1661
      %1678 = vst.msk [vmem:[%s388 + $0x68] sm:$0xff] %vm1472, %v1662
      %1679 = vst.msk [vmem:[%s388 + $0x70] sm:$0xff] %vm1472, %v1663
      %1680 = vst.msk [vmem:[%s388 + $0x78] sm:$0xff] %vm1472, %v1664
      %s1681 = smul.u32 16, %s22
      %p1682 = scmp.lt.s32.totalorder %s1681, 31
      %s1683 = scalar_select %p1682, %s1681, 31
      %s1684 = smul.addr %s1683, 8
      %s1685 = scalar_lea.vmem %s11, %s1684
      // Predicated region
      $region65: #{tpu_custom_call.1} parent=63 // pred_check
        %p1686 = pneg %p276
      $region66: #{tpu_custom_call.1} parent=63 // pred_check_branch
        %1688 = sbr.rel (%p1686) target = $region68
      $region67: #{tpu_custom_call.1} parent=63 // pred_region
        %s1689 = smul.u32 16, %s22
      $region68: #{tpu_custom_call.1} parent=63 // pred_fallthru
        _
    $region64: #{tpu_custom_call.1} parent=5 // pred_fallthru
      _
    %p1690 = scmp.le.s32.totalorder 2, %s17
    // Predicated region
    $region69: #{tpu_custom_call.1} parent=5 // pred_check
      %p1691 = pneg %p1690
    $region70: #{tpu_custom_call.1} parent=5 // pred_check_branch
      %1693 = sbr.rel (%p1691) target = $region72
    $region71: #{tpu_custom_call.1} parent=5 // pred_region
      %s1694 = ssub.s32 %s17, 2
      // Predicated region
      $region73: #{tpu_custom_call.1} parent=71 // pred_check
        %p1695 = pneg %p282
      $region74: #{tpu_custom_call.1} parent=71 // pred_check_branch
        %1697 = sbr.rel (%p1695) target = $region76
      $region75: #{tpu_custom_call.1} parent=71 // pred_region
        %s1698 = smul.u32 16, %s23
        %p1699 = scmp.lt.s32.totalorder %s1698, 31
        %s1700 = scalar_select %p1699, %s1698, 31
        %s1701 = smul.addr %s1700, 8
        %s1702 = scalar_lea.vmem %s11, %s1701
      $region76: #{tpu_custom_call.1} parent=71 // pred_fallthru
        _
    $region72: #{tpu_custom_call.1} parent=5 // pred_fallthru
      _
  $region6: #{tpu_custom_call.1} parent=0 // loop_footer
    %s21 = sadd.s32 1, %s17
  $region7: #{tpu_custom_call.1} parent=0 // loop_footer_branch
    %16 = sbr.rel target = $region3
  $region8: #{tpu_custom_call.1} parent=0 // loop_exit
    _

</llo_original>
